<compile_context>
chip_gen: v7x
topology: tpu7x:2x2x1
jax: 0.10.0
libtpu: 0.0.40
codegen_flags: <defaults>
</compile_context>

<pallas_src>
import math
from functools import partial

import jax
import jax.numpy as jnp
from jax import lax
from jax.experimental import pallas as pl
from jax.experimental.pallas import tpu as pltpu


# ---------------------------------------------------------------------------
# Fused kernel
# ---------------------------------------------------------------------------

def _edge_gate(s, adj_nonneg, p):
    """e = relu(where(s > 0, s, -p*s)) * adj_nonneg, with adj_nonneg >= 0.

    For p >= 0 this equals max(t, -p*t) with t = s * adj_nonneg, which is two
    fewer VALU ops per edge on the N^2 hot path.  p is a compile-time float.
    """
    if p >= 0.0:
        t = s * adj_nonneg
        return jnp.maximum(t, (-p) * t)
    g = jnp.maximum(jnp.where(s > 0, s, (-p) * s), jnp.zeros_like(s))
    return g * adj_nonneg


def _hlgat_fused_kernel(x_ref, w1t_ref, b1_ref, adj_ref,
                        wcat_ref, wgs_ref, gb_ref, brl_ref,
                        w2t_ref, b2_ref, o_ref,
                        *, num_layers, hid, eps, p_l, p_h, gate_bf16):
    f32, bf16 = jnp.float32, jnp.bfloat16
    gdt = bf16 if gate_bf16 else f32
    D = hid

    # ---- t1 + ReLU (dropout == identity in eval) ---------------------------
    h = jnp.dot(x_ref[...], w1t_ref[...], preferred_element_type=f32)
    h = jnp.maximum(h + b1_ref[...], 0.0)                 # (N, D) f32
    eraw = eps * h                                        # hoisted eps * raw

    # adj_dd = A * d_dst * d_src (>= 0), streamed from HBM as bf16.
    adj_g = adj_ref[...]
    if not gate_bf16:
        adj_g = adj_g.astype(f32)                         # v5e: no bf16 VALU

    # TODO(synk): for LAYER_NUM >> 4 switch this static unroll to a
    #   lax.fori_loop carrying h and indexing the stacked weight refs on their
    #   leading axis (bounds vreg live ranges / code size).
    for l in range(num_layers):                           # static unroll (L=2)
        h_bf = h.astype(bf16)

        # -- merged projections: [h@WRL_lo | h@WRL_hi | h@W_gate_dst] --------
        proj = jnp.dot(h_bf, wcat_ref[l],
                       preferred_element_type=f32)        # (N, 2D+2) f32
        hl = proj[:, 0:D]                                 # (N, D)
        hh = proj[:, D:2 * D]                             # (N, D)
        gd = (proj[:, 2 * D:2 * D + 2] + gb_ref[l]).astype(gdt)   # (N, 2) biases folded
        # src halves of both gates, produced row-major (2, N) so they can be
        # broadcast along lanes without an in-kernel transpose.
        gs = lax.dot_general(wgs_ref[l], h_bf, (((0,), (1,)), ((), ())),
                             preferred_element_type=f32).astype(gdt)  # (2, N)

        # -- dense per-edge gates on the VPU ----------------------------------
        s_low = gd[:, 0:1] + gs[0:1, :]                   # (N, N)
        s_hip = gd[:, 1:2] + gs[1:2, :]
        e_low = _edge_gate(s_low, adj_g, p_l)
        e_hip = _edge_gate(s_hip, adj_g, p_h)             # positive part; sign folded below

        # -- contraction-stacked aggregation: z = [e_low | e_hip] @ [hl; -hh] -
        e_cat = jnp.concatenate([e_low.astype(bf16), e_hip.astype(bf16)],
                                axis=1)                   # (N, 2N) bf16
        hv = jnp.concatenate([hl.astype(bf16), (-hh).astype(bf16)],
                             axis=0)                      # (2N, D) bf16
        z = jnp.dot(e_cat, hv, preferred_element_type=f32)
        h = eraw + z + brl_ref[l]                         # (N, D) f32

    # ---- t2 + log_softmax ----------------------------------------------------
    logits = (jnp.dot(h, w2t_ref[...], preferred_element_type=f32)
              + b2_ref[...])
    m = jnp.max(logits, axis=1, keepdims=True)
    lse = jnp.log(jnp.sum(jnp.exp(logits - m), axis=1, keepdims=True)) + m
    o_ref[...] = logits - lse


# ---------------------------------------------------------------------------
# Wrapper
# ---------------------------------------------------------------------------

_VMEM = pl.BlockSpec(memory_space=pltpu.MemorySpace.VMEM)


def _gate_math_in_bf16():
    """bf16 elementwise gate math only pays off on chips with a bf16 VALU."""
    try:
        kind = jax.devices()[0].device_kind.lower()
    except Exception:
        return True
    return not any(v in kind for v in ("v2", "v3", "v4", "v5"))


def hlgat_forward(x, params, adj_dd, eps, p_l, p_h):
    N, in_dim = x.shape
    hid = int(params["w1t"].shape[1])
    out_dim = int(params["w2t"].shape[1])
    num_layers = int(params["wcat"].shape[0])

    kern = partial(_hlgat_fused_kernel,
                   num_layers=num_layers, hid=hid,
                   eps=float(eps), p_l=float(p_l), p_h=float(p_h),
                   gate_bf16=_gate_math_in_bf16())

    args = (x, params["w1t"], params["b1"], adj_dd,
            params["wcat"], params["wgs"], params["gb"], params["brl"],
            params["w2t"], params["b2"])

    # Advisory cost estimate (helps XLA schedule around the custom call).
    flops = (2 * N * in_dim * hid + 2 * N * hid * out_dim
             + num_layers * (2 * N * hid * (2 * hid + 2)    # merged projection
                             + 2 * N * hid * 2              # src-gate projection
                             + 8 * N * N                    # per-edge gate chain
                             + 2 * N * (2 * N) * hid        # stacked aggregation
                             + 4 * N * hid))                # residual / bias
    bytes_accessed = sum(int(a.size) * a.dtype.itemsize for a in args)
    bytes_accessed += N * out_dim * 4

    # Fully VMEM-resident design: adj + (N,N) gate temporaries ~ 14*N^2 bytes.
    vmem_limit = int(min(64 * 1024 * 1024,
                         max(32 * 1024 * 1024, 14 * N * N + 8 * 1024 * 1024)))

    # TODO(synk): for large N (adj no longer VMEM-resident, or to use both v7x
    #   TensorCores) switch to one dst-row-tiled pallas_call per HL layer:
    #   grid=(pl.cdiv(N, TM),), adj BlockSpec (TM, N), output (TM, D), h/raw
    #   kept full via index_map -> block 0, dimension_semantics=("parallel",).
    return pl.pallas_call(
        kern,
        out_shape=jax.ShapeDtypeStruct((N, out_dim), jnp.float32),
        in_specs=[_VMEM] * len(args),
        out_specs=_VMEM,
        compiler_params=pltpu.CompilerParams(vmem_limit_bytes=vmem_limit),
        cost_estimate=pl.CostEstimate(flops=int(flops),
                                      transcendentals=int(N * (out_dim + 1)),
                                      bytes_accessed=int(bytes_accessed)),
    )(*args)


# ---------------------------------------------------------------------------
# Pure-JAX reference (HIGHEST precision, mirrors the torch module)
# ---------------------------------------------------------------------------

def hlgat_reference(x, ref_params, adj, d_col, d_row, eps, p_l, p_h):
    hp = jax.lax.Precision.HIGHEST
    mm = lambda a, b: jnp.dot(a, b, precision=hp)
    h = jnp.maximum(mm(x, ref_params["w1t"]) + ref_params["b1"], 0.0)
    raw = h
    D = h.shape[1]
    for lp in ref_params["layers"]:
        wl, wh, wrlt = lp["wl"], lp["wh"], lp["wrlt"]
        s_low = mm(h, wl[:D]) + mm(h, wl[D:]).T + lp["b_low"]
        g_low = jnp.maximum(jnp.where(s_low > 0, s_low, -p_l * s_low), 0.0)
        e_low = g_low * d_col * d_row * adj
        z_low = mm(e_low, h)
        s_high = mm(h, wh[:D]) + mm(h, wh[D:]).T + lp["b_high"]
        g_high = -jnp.maximum(jnp.where(s_high > 0, s_high, -p_h * s_high), 0.0)
        e_high = g_high * d_col * d_row * adj
        z_high = mm(e_high, h)
        z = mm(z_low, wrlt[:D]) + mm(z_high, wrlt[D:]) + lp["brl"]
        h = eps * raw + z
    logits = mm(h, ref_params["w2t"]) + ref_params["b2"]
    return jax.nn.log_softmax(logits, axis=1)


# ---------------------------------------------------------------------------
# Deterministic parameter / graph construction
# ---------------------------------------------------------------------------

def xavier_normal(key, out_dim, in_dim, gain=1.414):
    std = gain * math.sqrt(2.0 / (in_dim + out_dim))
    return std * jax.random.normal(key, (out_dim, in_dim), jnp.float32)


def torch_bias(key, out_dim, in_dim):
    bound = 1.0 / math.sqrt(in_dim)
    return jax.random.uniform(key, (out_dim,), jnp.float32, -bound, bound)


if __name__ == "__main__":
    N, IN_DIM, HID, OUT = 128, 16, 32, 8
    LAYER_NUM, EPS, P_L, P_H = 2, 0.3, 0.5, 0.5

    key = jax.random.PRNGKey(0)
    ks = jax.random.split(key, 6 + 6 * LAYER_NUM + 2)
    ki = iter(ks)

    # t1 / t2 (xavier_normal weights, torch-default-uniform biases)
    w1 = xavier_normal(next(ki), HID, IN_DIM)
    b1 = torch_bias(next(ki), HID, IN_DIM).reshape(1, HID)
    w2 = xavier_normal(next(ki), OUT, HID)
    b2 = torch_bias(next(ki), OUT, HID).reshape(1, OUT)

    layers = []
    for _ in range(LAYER_NUM):
        gl_w = xavier_normal(next(ki), 1, 2 * HID)            # gate_low.weight  (1, 2H)
        gl_b = torch_bias(next(ki), 1, 2 * HID)[0]
        gh_w = xavier_normal(next(ki), 1, 2 * HID)            # gate_high.weight (1, 2H)
        gh_b = torch_bias(next(ki), 1, 2 * HID)[0]
        wrl_w = xavier_normal(next(ki), HID, 2 * HID)         # WRL.weight (H, 2H)
        wrl_b = torch_bias(next(ki), HID, 2 * HID).reshape(1, HID)
        layers.append(dict(
            wl=gl_w.T,               # (2H, 1)
            b_low=gl_b,
            wh=gh_w.T,               # (2H, 1)
            b_high=gh_b,
            wrlt=wrl_w.T,            # (2H, H)
            brl=wrl_b,               # (1, H)
        ))

    ref_params = dict(w1t=w1.T, b1=b1, w2t=w2.T, b2=b2, layers=layers)

    # Packed / stacked kernel parameters (bf16 where consumed by bf16 MXU calls)
    wcat_l, wgs_l = [], []
    for lp in layers:
        wgd = jnp.concatenate([lp["wl"][:HID], lp["wh"][:HID]], axis=1)   # (H, 2) dst halves
        wgs = jnp.concatenate([lp["wl"][HID:], lp["wh"][HID:]], axis=1)   # (H, 2) src halves
        wcat_l.append(jnp.concatenate(
            [lp["wrlt"][:HID], lp["wrlt"][HID:], wgd], axis=1))           # (H, 2H+2)
        wgs_l.append(wgs)
    wcat = jnp.stack(wcat_l).astype(jnp.bfloat16)          # (L, H, 2H+2)
    wgs = jnp.stack(wgs_l).astype(jnp.bfloat16)            # (L, H, 2)
    gb = jnp.stack([jnp.stack([lp["b_low"], lp["b_high"]]).reshape(1, 2)
                    for lp in layers])                     # (L, 1, 2) f32
    brl = jnp.stack([lp["brl"] for lp in layers])          # (L, 1, H) f32

    params = dict(w1t=w1.T, b1=b1, w2t=w2.T, b2=b2,
                  wcat=wcat, wgs=wgs, gb=gb, brl=brl)

    # Dense graph: symmetric random adjacency with self-loops; d = deg^{-1/2}.
    adj = (jax.random.uniform(next(ki), (N, N)) < 0.06).astype(jnp.float32)
    adj = jnp.maximum(adj, adj.T)
    adj = adj.at[jnp.arange(N), jnp.arange(N)].set(1.0)
    deg = jnp.sum(adj, axis=1, keepdims=True)
    d_col = deg ** -0.5                                    # (N, 1)
    d_row = d_col.reshape(1, N)                            # (1, N)
    # Degree-scaled adjacency, precomputed once, streamed as bf16.
    adj_dd = (adj * d_col * d_row).astype(jnp.bfloat16)    # (N, N)
    # The fast max(t, -p*t) gate path requires adj_dd >= 0 (true by
    # construction) and p_l, p_h >= 0 (the p < 0 case uses the exact
    # where/relu branch inside the kernel).
    assert bool(jnp.all(adj_dd >= 0))

    # Node features
    x = jax.random.normal(next(ki), (N, IN_DIM), jnp.float32)

    out = hlgat_forward(x, params, adj_dd, EPS, P_L, P_H)
    out = jax.block_until_ready(out)

    ref = hlgat_reference(x, ref_params, adj, d_col, d_row, EPS, P_L, P_H)
    assert out.shape == (N, OUT)
    assert bool(jnp.all(jnp.isfinite(out)))
    # bf16 weights + bf16 gate chain + bf16 aggregation matmuls => looser
    # tolerance than a pure-f32 comparison (documented precision trade-off).
    assert bool(jnp.allclose(out, ref, atol=5e-2, rtol=5e-2)), (
        float(jnp.max(jnp.abs(out - ref))))

    print("KERNEL_OK")
</pallas_src>

<mosaic_0001>
module attributes {stable_mosaic.version = 11 : i64} {
  func.func @_hlgat_fused_kernel(%arg0: memref<128x16xf32, #tpu.memory_space<vmem>>, %arg1: memref<16x32xf32, #tpu.memory_space<vmem>>, %arg2: memref<1x32xf32, #tpu.memory_space<vmem>>, %arg3: memref<128x128xbf16, #tpu.memory_space<vmem>>, %arg4: memref<2x32x66xbf16, #tpu.memory_space<vmem>>, %arg5: memref<2x32x2xbf16, #tpu.memory_space<vmem>>, %arg6: memref<2x1x2xf32, #tpu.memory_space<vmem>>, %arg7: memref<2x1x32xf32, #tpu.memory_space<vmem>>, %arg8: memref<32x8xf32, #tpu.memory_space<vmem>>, %arg9: memref<1x8xf32, #tpu.memory_space<vmem>>, %arg10: memref<128x8xf32, #tpu.memory_space<vmem>>) attributes {dimension_semantics = [], scalar_prefetch = 0 : i64, scratch_operands = 0 : i64, tpu.core_type = #tpu.core_type<tc>} {
    %c0 = arith.constant 0 : index
    %c0_0 = arith.constant 0 : index
    %0 = vector.load %arg0[%c0, %c0_0] : memref<128x16xf32, #tpu.memory_space<vmem>>, vector<128x16xf32>
    %c0_1 = arith.constant 0 : index
    %c0_2 = arith.constant 0 : index
    %1 = vector.load %arg1[%c0_1, %c0_2] : memref<16x32xf32, #tpu.memory_space<vmem>>, vector<16x32xf32>
    %cst = arith.constant dense<0.000000e+00> : vector<128x32xf32>
    %2 = tpu.matmul %0, %1, %cst {dimension_numbers = #tpu.dot_dimension_numbers<[1], [0], [0], [1], [0, 0, 1, 1], [], []>} : vector<128x16xf32>, vector<16x32xf32>, vector<128x32xf32> -> vector<128x32xf32>
    %c0_3 = arith.constant 0 : index
    %c0_4 = arith.constant 0 : index
    %3 = vector.load %arg2[%c0_3, %c0_4] : memref<1x32xf32, #tpu.memory_space<vmem>>, vector<1x32xf32>
    %4 = vector.broadcast %3 : vector<1x32xf32> to vector<128x32xf32>
    %5 = arith.addf %2, %4 : vector<128x32xf32>
    %cst_5 = arith.constant 0.000000e+00 : f32
    %6 = vector.broadcast %cst_5 : f32 to vector<128x32xf32>
    %7 = arith.maximumf %5, %6 : vector<128x32xf32>
    %cst_6 = arith.constant 3.000000e-01 : f32
    %8 = vector.broadcast %cst_6 : f32 to vector<128x32xf32>
    %9 = arith.mulf %8, %7 : vector<128x32xf32>
    %c0_7 = arith.constant 0 : index
    %c0_8 = arith.constant 0 : index
    %10 = vector.load %arg3[%c0_7, %c0_8] : memref<128x128xbf16, #tpu.memory_space<vmem>>, vector<128x128xbf16>
    %11 = arith.truncf %7 : vector<128x32xf32> to vector<128x32xbf16>
    %c0_9 = arith.constant 0 : index
    %c0_10 = arith.constant 0 : index
    %c0_11 = arith.constant 0 : index
    %12 = vector.load %arg4[%c0_9, %c0_10, %c0_11] : memref<2x32x66xbf16, #tpu.memory_space<vmem>>, vector<1x32x66xbf16>
    %13 = vector.shape_cast %12 : vector<1x32x66xbf16> to vector<32x66xbf16>
    %cst_12 = arith.constant dense<0.000000e+00> : vector<128x66xf32>
    %14 = tpu.matmul %11, %13, %cst_12 {dimension_numbers = #tpu.dot_dimension_numbers<[1], [0], [0], [1], [0, 0, 1, 1], [], []>} : vector<128x32xbf16>, vector<32x66xbf16>, vector<128x66xf32> -> vector<128x66xf32>
    %15 = vector.extract_strided_slice %14 {offsets = [0, 0], sizes = [128, 32], strides = [1, 1]} : vector<128x66xf32> to vector<128x32xf32>
    %16 = vector.extract_strided_slice %14 {offsets = [0, 32], sizes = [128, 32], strides = [1, 1]} : vector<128x66xf32> to vector<128x32xf32>
    %17 = vector.extract_strided_slice %14 {offsets = [0, 64], sizes = [128, 2], strides = [1, 1]} : vector<128x66xf32> to vector<128x2xf32>
    %c0_13 = arith.constant 0 : index
    %c0_14 = arith.constant 0 : index
    %c0_15 = arith.constant 0 : index
    %18 = vector.load %arg6[%c0_13, %c0_14, %c0_15] : memref<2x1x2xf32, #tpu.memory_space<vmem>>, vector<1x1x2xf32>
    %19 = vector.shape_cast %18 : vector<1x1x2xf32> to vector<1x2xf32>
    %20 = vector.broadcast %19 : vector<1x2xf32> to vector<128x2xf32>
    %21 = arith.addf %17, %20 : vector<128x2xf32>
    %22 = arith.truncf %21 : vector<128x2xf32> to vector<128x2xbf16>
    %c0_16 = arith.constant 0 : index
    %c0_17 = arith.constant 0 : index
    %c0_18 = arith.constant 0 : index
    %23 = vector.load %arg5[%c0_16, %c0_17, %c0_18] : memref<2x32x2xbf16, #tpu.memory_space<vmem>>, vector<1x32x2xbf16>
    %24 = vector.shape_cast %23 : vector<1x32x2xbf16> to vector<32x2xbf16>
    %cst_19 = arith.constant dense<0.000000e+00> : vector<2x128xf32>
    %25 = tpu.matmul %24, %11, %cst_19 {dimension_numbers = #tpu.dot_dimension_numbers<[0], [1], [1], [0], [0, 1, 1, 0], [], []>} : vector<32x2xbf16>, vector<128x32xbf16>, vector<2x128xf32> -> vector<2x128xf32>
    %26 = arith.truncf %25 : vector<2x128xf32> to vector<2x128xbf16>
    %27 = vector.extract_strided_slice %22 {offsets = [0, 0], sizes = [128, 1], strides = [1, 1]} : vector<128x2xbf16> to vector<128x1xbf16>
    %28 = vector.extract_strided_slice %26 {offsets = [0, 0], sizes = [1, 128], strides = [1, 1]} : vector<2x128xbf16> to vector<1x128xbf16>
    %29 = vector.broadcast %27 : vector<128x1xbf16> to vector<128x128xbf16>
    %30 = vector.broadcast %28 : vector<1x128xbf16> to vector<128x128xbf16>
    %31 = arith.addf %29, %30 : vector<128x128xbf16>
    %32 = vector.extract_strided_slice %22 {offsets = [0, 1], sizes = [128, 1], strides = [1, 1]} : vector<128x2xbf16> to vector<128x1xbf16>
    %33 = vector.extract_strided_slice %26 {offsets = [1, 0], sizes = [1, 128], strides = [1, 1]} : vector<2x128xbf16> to vector<1x128xbf16>
    %34 = vector.broadcast %32 : vector<128x1xbf16> to vector<128x128xbf16>
    %35 = vector.broadcast %33 : vector<1x128xbf16> to vector<128x128xbf16>
    %36 = arith.addf %34, %35 : vector<128x128xbf16>
    %37 = arith.mulf %31, %10 : vector<128x128xbf16>
    %cst_20 = arith.constant -5.000000e-01 : bf16
    %38 = vector.broadcast %cst_20 : bf16 to vector<128x128xbf16>
    %39 = arith.mulf %38, %37 : vector<128x128xbf16>
    %40 = arith.maximumf %37, %39 : vector<128x128xbf16>
    %41 = arith.mulf %36, %10 : vector<128x128xbf16>
    %cst_21 = arith.constant -5.000000e-01 : bf16
    %42 = vector.broadcast %cst_21 : bf16 to vector<128x128xbf16>
    %43 = arith.mulf %42, %41 : vector<128x128xbf16>
    %44 = arith.maximumf %41, %43 : vector<128x128xbf16>
    %45 = tpu.concatenate %40, %44 in 1 : vector<128x128xbf16>, vector<128x128xbf16> -> vector<128x256xbf16>
    %46 = arith.truncf %15 : vector<128x32xf32> to vector<128x32xbf16>
    %cst_22 = arith.constant 0.000000e+00 : f32
    %47 = vector.broadcast %cst_22 : f32 to vector<128x32xf32>
    %48 = arith.subf %47, %16 : vector<128x32xf32>
    %49 = arith.truncf %48 : vector<128x32xf32> to vector<128x32xbf16>
    %50 = tpu.concatenate %46, %49 in 0 : vector<128x32xbf16>, vector<128x32xbf16> -> vector<256x32xbf16>
    %cst_23 = arith.constant dense<0.000000e+00> : vector<128x32xf32>
    %51 = tpu.matmul %45, %50, %cst_23 {dimension_numbers = #tpu.dot_dimension_numbers<[1], [0], [0], [1], [0, 0, 1, 1], [], []>} : vector<128x256xbf16>, vector<256x32xbf16>, vector<128x32xf32> -> vector<128x32xf32>
    %52 = arith.addf %9, %51 : vector<128x32xf32>
    %c0_24 = arith.constant 0 : index
    %c0_25 = arith.constant 0 : index
    %c0_26 = arith.constant 0 : index
    %53 = vector.load %arg7[%c0_24, %c0_25, %c0_26] : memref<2x1x32xf32, #tpu.memory_space<vmem>>, vector<1x1x32xf32>
    %54 = vector.shape_cast %53 : vector<1x1x32xf32> to vector<1x32xf32>
    %55 = vector.broadcast %54 : vector<1x32xf32> to vector<128x32xf32>
    %56 = arith.addf %52, %55 : vector<128x32xf32>
    %57 = arith.truncf %56 : vector<128x32xf32> to vector<128x32xbf16>
    %c1 = arith.constant 1 : index
    %c0_27 = arith.constant 0 : index
    %c0_28 = arith.constant 0 : index
    %58 = vector.load %arg4[%c1, %c0_27, %c0_28] : memref<2x32x66xbf16, #tpu.memory_space<vmem>>, vector<1x32x66xbf16>
    %59 = vector.shape_cast %58 : vector<1x32x66xbf16> to vector<32x66xbf16>
    %cst_29 = arith.constant dense<0.000000e+00> : vector<128x66xf32>
    %60 = tpu.matmul %57, %59, %cst_29 {dimension_numbers = #tpu.dot_dimension_numbers<[1], [0], [0], [1], [0, 0, 1, 1], [], []>} : vector<128x32xbf16>, vector<32x66xbf16>, vector<128x66xf32> -> vector<128x66xf32>
    %61 = vector.extract_strided_slice %60 {offsets = [0, 0], sizes = [128, 32], strides = [1, 1]} : vector<128x66xf32> to vector<128x32xf32>
    %62 = vector.extract_strided_slice %60 {offsets = [0, 32], sizes = [128, 32], strides = [1, 1]} : vector<128x66xf32> to vector<128x32xf32>
    %63 = vector.extract_strided_slice %60 {offsets = [0, 64], sizes = [128, 2], strides = [1, 1]} : vector<128x66xf32> to vector<128x2xf32>
    %c1_30 = arith.constant 1 : index
    %c0_31 = arith.constant 0 : index
    %c0_32 = arith.constant 0 : index
    %64 = vector.load %arg6[%c1_30, %c0_31, %c0_32] : memref<2x1x2xf32, #tpu.memory_space<vmem>>, vector<1x1x2xf32>
    %65 = vector.shape_cast %64 : vector<1x1x2xf32> to vector<1x2xf32>
    %66 = vector.broadcast %65 : vector<1x2xf32> to vector<128x2xf32>
    %67 = arith.addf %63, %66 : vector<128x2xf32>
    %68 = arith.truncf %67 : vector<128x2xf32> to vector<128x2xbf16>
    %c1_33 = arith.constant 1 : index
    %c0_34 = arith.constant 0 : index
    %c0_35 = arith.constant 0 : index
    %69 = vector.load %arg5[%c1_33, %c0_34, %c0_35] : memref<2x32x2xbf16, #tpu.memory_space<vmem>>, vector<1x32x2xbf16>
    %70 = vector.shape_cast %69 : vector<1x32x2xbf16> to vector<32x2xbf16>
    %cst_36 = arith.constant dense<0.000000e+00> : vector<2x128xf32>
    %71 = tpu.matmul %70, %57, %cst_36 {dimension_numbers = #tpu.dot_dimension_numbers<[0], [1], [1], [0], [0, 1, 1, 0], [], []>} : vector<32x2xbf16>, vector<128x32xbf16>, vector<2x128xf32> -> vector<2x128xf32>
    %72 = arith.truncf %71 : vector<2x128xf32> to vector<2x128xbf16>
    %73 = vector.extract_strided_slice %68 {offsets = [0, 0], sizes = [128, 1], strides = [1, 1]} : vector<128x2xbf16> to vector<128x1xbf16>
    %74 = vector.extract_strided_slice %72 {offsets = [0, 0], sizes = [1, 128], strides = [1, 1]} : vector<2x128xbf16> to vector<1x128xbf16>
    %75 = vector.broadcast %73 : vector<128x1xbf16> to vector<128x128xbf16>
    %76 = vector.broadcast %74 : vector<1x128xbf16> to vector<128x128xbf16>
    %77 = arith.addf %75, %76 : vector<128x128xbf16>
    %78 = vector.extract_strided_slice %68 {offsets = [0, 1], sizes = [128, 1], strides = [1, 1]} : vector<128x2xbf16> to vector<128x1xbf16>
    %79 = vector.extract_strided_slice %72 {offsets = [1, 0], sizes = [1, 128], strides = [1, 1]} : vector<2x128xbf16> to vector<1x128xbf16>
    %80 = vector.broadcast %78 : vector<128x1xbf16> to vector<128x128xbf16>
    %81 = vector.broadcast %79 : vector<1x128xbf16> to vector<128x128xbf16>
    %82 = arith.addf %80, %81 : vector<128x128xbf16>
    %83 = arith.mulf %77, %10 : vector<128x128xbf16>
    %cst_37 = arith.constant -5.000000e-01 : bf16
    %84 = vector.broadcast %cst_37 : bf16 to vector<128x128xbf16>
    %85 = arith.mulf %84, %83 : vector<128x128xbf16>
    %86 = arith.maximumf %83, %85 : vector<128x128xbf16>
    %87 = arith.mulf %82, %10 : vector<128x128xbf16>
    %cst_38 = arith.constant -5.000000e-01 : bf16
    %88 = vector.broadcast %cst_38 : bf16 to vector<128x128xbf16>
    %89 = arith.mulf %88, %87 : vector<128x128xbf16>
    %90 = arith.maximumf %87, %89 : vector<128x128xbf16>
    %91 = tpu.concatenate %86, %90 in 1 : vector<128x128xbf16>, vector<128x128xbf16> -> vector<128x256xbf16>
    %92 = arith.truncf %61 : vector<128x32xf32> to vector<128x32xbf16>
    %cst_39 = arith.constant 0.000000e+00 : f32
    %93 = vector.broadcast %cst_39 : f32 to vector<128x32xf32>
    %94 = arith.subf %93, %62 : vector<128x32xf32>
    %95 = arith.truncf %94 : vector<128x32xf32> to vector<128x32xbf16>
    %96 = tpu.concatenate %92, %95 in 0 : vector<128x32xbf16>, vector<128x32xbf16> -> vector<256x32xbf16>
    %cst_40 = arith.constant dense<0.000000e+00> : vector<128x32xf32>
    %97 = tpu.matmul %91, %96, %cst_40 {dimension_numbers = #tpu.dot_dimension_numbers<[1], [0], [0], [1], [0, 0, 1, 1], [], []>} : vector<128x256xbf16>, vector<256x32xbf16>, vector<128x32xf32> -> vector<128x32xf32>
    %98 = arith.addf %9, %97 : vector<128x32xf32>
    %c1_41 = arith.constant 1 : index
    %c0_42 = arith.constant 0 : index
    %c0_43 = arith.constant 0 : index
    %99 = vector.load %arg7[%c1_41, %c0_42, %c0_43] : memref<2x1x32xf32, #tpu.memory_space<vmem>>, vector<1x1x32xf32>
    %100 = vector.shape_cast %99 : vector<1x1x32xf32> to vector<1x32xf32>
    %101 = vector.broadcast %100 : vector<1x32xf32> to vector<128x32xf32>
    %102 = arith.addf %98, %101 : vector<128x32xf32>
    %c0_44 = arith.constant 0 : index
    %c0_45 = arith.constant 0 : index
    %103 = vector.load %arg8[%c0_44, %c0_45] : memref<32x8xf32, #tpu.memory_space<vmem>>, vector<32x8xf32>
    %cst_46 = arith.constant dense<0.000000e+00> : vector<128x8xf32>
    %104 = tpu.matmul %102, %103, %cst_46 {dimension_numbers = #tpu.dot_dimension_numbers<[1], [0], [0], [1], [0, 0, 1, 1], [], []>} : vector<128x32xf32>, vector<32x8xf32>, vector<128x8xf32> -> vector<128x8xf32>
    %c0_47 = arith.constant 0 : index
    %c0_48 = arith.constant 0 : index
    %105 = vector.load %arg9[%c0_47, %c0_48] : memref<1x8xf32, #tpu.memory_space<vmem>>, vector<1x8xf32>
    %106 = vector.broadcast %105 : vector<1x8xf32> to vector<128x8xf32>
    %107 = arith.addf %104, %106 : vector<128x8xf32>
    %cst_49 = arith.constant dense<0xFF800000> : vector<128xf32>
    %108 = vector.multi_reduction <maximumf>, %107, %cst_49 [1] : vector<128x8xf32> to vector<128xf32>
    %109 = vector.shape_cast %108 : vector<128xf32> to vector<128x1xf32>
    %110 = vector.broadcast %109 : vector<128x1xf32> to vector<128x8xf32>
    %111 = arith.subf %107, %110 : vector<128x8xf32>
    %112 = math.exp %111 : vector<128x8xf32>
    %cst_50 = arith.constant dense<0.000000e+00> : vector<128xf32>
    %113 = vector.multi_reduction <add>, %112, %cst_50 [1] : vector<128x8xf32> to vector<128xf32>
    %114 = vector.shape_cast %113 : vector<128xf32> to vector<128x1xf32>
    %115 = math.log %114 : vector<128x1xf32>
    %116 = arith.addf %115, %109 : vector<128x1xf32>
    %117 = vector.broadcast %116 : vector<128x1xf32> to vector<128x8xf32>
    %118 = arith.subf %107, %117 : vector<128x8xf32>
    %c0_51 = arith.constant 0 : index
    %c0_52 = arith.constant 0 : index
    %119 = vector.load %arg10[%c0_51, %c0_52] : memref<128x8xf32, #tpu.memory_space<vmem>>, vector<128x8xf32>
    tpu.vector_store %arg10[%c0_51, %c0_52], %118 {strides = array<i32>} : memref<128x8xf32, #tpu.memory_space<vmem>>, vector<128x8xf32>,
    return
  }
}

</mosaic_0001>

<llo_original>
// kernel: tpu_custom_call.1
$region0: #{tpu_custom_call.1}
  #allocation0 [shape = 'u32[]', space=smem, size = 0x4, offset = 0x4, fixed_abs, tag = 'smem constant byte address 0x4 - core index']
  #allocation1 [shape = 'u32[144,128]{1,0:T(1,128)}', space=vmem, size = 0x12000, scoped, tag = 'internal scratch']
  %s0 = inlined_call_operand.vmem [shape: f32[128,16], index: 0, kind: input, shape index: {}]
  %s1 = inlined_call_operand.vmem [shape: f32[16,32], index: 1, kind: input, shape index: {}]
  %s2 = inlined_call_operand.vmem [shape: f32[1,32], index: 2, kind: input, shape index: {}]
  %s3 = inlined_call_operand.vmem [shape: bf16[128,128], index: 3, kind: input, shape index: {}]
  %s4 = inlined_call_operand.vmem [shape: bf16[2,32,66], index: 4, kind: input, shape index: {}]
  %s5 = inlined_call_operand.vmem [shape: bf16[2,32,2], index: 5, kind: input, shape index: {}]
  %s6 = inlined_call_operand.vmem [shape: f32[2,1,2], index: 6, kind: input, shape index: {}]
  %s7 = inlined_call_operand.vmem [shape: f32[2,1,32], index: 7, kind: input, shape index: {}]
  %s8 = inlined_call_operand.vmem [shape: f32[32,8], index: 8, kind: input, shape index: {}]
  %s9 = inlined_call_operand.vmem [shape: f32[1,8], index: 9, kind: input, shape index: {}]
  %s10 = inlined_call_operand.vmem [shape: f32[128,8], index: 10, kind: output, shape index: {}]
  %s11 = sld [smem:[#allocation0]]
  $region50: #{tpu_custom_call.1} parent=0
    _
  %s13 = ssub.s32 1, %s11
  %s14 = scalar_select 0, %s13, %s11
  // Predicated region
  $region2: #{tpu_custom_call.1} parent=0 // pred_check
    _
  $region3: #{tpu_custom_call.1} parent=0 // pred_check_branch
    %16 = sbr.rel (0) target = $region5
  $region4: #{tpu_custom_call.1} parent=0 // pred_region
    _
  $region5: #{tpu_custom_call.1} parent=0 // pred_fallthru
    _
  // Predicated region
  $region6: #{tpu_custom_call.1} parent=0 // pred_check
    _
  $region7: #{tpu_custom_call.1} parent=0 // pred_check_branch
    %18 = sbr.rel (0) target = $region9
  $region8: #{tpu_custom_call.1} parent=0 // pred_region
    _
  $region9: #{tpu_custom_call.1} parent=0 // pred_fallthru
    _
  // Predicated region
  $region10: #{tpu_custom_call.1} parent=0 // pred_check
    _
  $region11: #{tpu_custom_call.1} parent=0 // pred_check_branch
    %20 = sbr.rel (0) target = $region13
  $region12: #{tpu_custom_call.1} parent=0 // pred_region
    _
  $region13: #{tpu_custom_call.1} parent=0 // pred_fallthru
    _
  // Predicated region
  $region14: #{tpu_custom_call.1} parent=0 // pred_check
    _
  $region15: #{tpu_custom_call.1} parent=0 // pred_check_branch
    %22 = sbr.rel (0) target = $region17
  $region16: #{tpu_custom_call.1} parent=0 // pred_region
    _
  $region17: #{tpu_custom_call.1} parent=0 // pred_fallthru
    _
  // Predicated region
  $region18: #{tpu_custom_call.1} parent=0 // pred_check
    _
  $region19: #{tpu_custom_call.1} parent=0 // pred_check_branch
    %24 = sbr.rel (0) target = $region21
  $region20: #{tpu_custom_call.1} parent=0 // pred_region
    _
  $region21: #{tpu_custom_call.1} parent=0 // pred_fallthru
    _
  // Predicated region
  $region22: #{tpu_custom_call.1} parent=0 // pred_check
    _
  $region23: #{tpu_custom_call.1} parent=0 // pred_check_branch
    %26 = sbr.rel (0) target = $region25
  $region24: #{tpu_custom_call.1} parent=0 // pred_region
    _
  $region25: #{tpu_custom_call.1} parent=0 // pred_fallthru
    _
  // Predicated region
  $region26: #{tpu_custom_call.1} parent=0 // pred_check
    _
  $region27: #{tpu_custom_call.1} parent=0 // pred_check_branch
    %28 = sbr.rel (0) target = $region29
  $region28: #{tpu_custom_call.1} parent=0 // pred_region
    _
  $region29: #{tpu_custom_call.1} parent=0 // pred_fallthru
    _
  // Predicated region
  $region30: #{tpu_custom_call.1} parent=0 // pred_check
    _
  $region31: #{tpu_custom_call.1} parent=0 // pred_check_branch
    %30 = sbr.rel (0) target = $region33
  $region32: #{tpu_custom_call.1} parent=0 // pred_region
    _
  $region33: #{tpu_custom_call.1} parent=0 // pred_fallthru
    _
  // Predicated region
  $region34: #{tpu_custom_call.1} parent=0 // pred_check
    _
  $region35: #{tpu_custom_call.1} parent=0 // pred_check_branch
    %32 = sbr.rel (0) target = $region37
  $region36: #{tpu_custom_call.1} parent=0 // pred_region
    _
  $region37: #{tpu_custom_call.1} parent=0 // pred_fallthru
    _
  // Predicated region
  $region38: #{tpu_custom_call.1} parent=0 // pred_check
    _
  $region39: #{tpu_custom_call.1} parent=0 // pred_check_branch
    %34 = sbr.rel (0) target = $region41
  $region40: #{tpu_custom_call.1} parent=0 // pred_region
    _
  $region41: #{tpu_custom_call.1} parent=0 // pred_fallthru
    _
  %v37 = vld [vmem:[%s0] sm:$0xff]
  %v38 = vld [vmem:[%s0 + $0x8] sm:$0xff]
  %v39 = vld [vmem:[%s0 + $0x10] sm:$0xff]
  %v40 = vld [vmem:[%s0 + $0x18] sm:$0xff]
  %v41 = vld [vmem:[%s0 + $0x20] sm:$0xff]
  %v42 = vld [vmem:[%s0 + $0x28] sm:$0xff]
  %v43 = vld [vmem:[%s0 + $0x30] sm:$0xff]
  %v44 = vld [vmem:[%s0 + $0x38] sm:$0xff]
  %v45 = vld [vmem:[%s0 + $0x40] sm:$0xff]
  %v46 = vld [vmem:[%s0 + $0x48] sm:$0xff]
  %v47 = vld [vmem:[%s0 + $0x50] sm:$0xff]
  %v48 = vld [vmem:[%s0 + $0x58] sm:$0xff]
  %v49 = vld [vmem:[%s0 + $0x60] sm:$0xff]
  %v50 = vld [vmem:[%s0 + $0x68] sm:$0xff]
  %v51 = vld [vmem:[%s0 + $0x70] sm:$0xff]
  %v52 = vld [vmem:[%s0 + $0x78] sm:$0xff]
  %v53 = vld [vmem:[%s1] sm:$0xff]
  %v54 = vld [vmem:[%s1 + $0x8] sm:$0xff]
  %v55 = vld [vmem:[%s2] sm:$0x1]
  %v57 = vlaneseq
  %v58 = vshrl.u32 %v57, 7
  %v59 = vsub.s32 0, %v58
  %v60 = vrot.slane %v55, %v59
  %vm62 = vcmask 130048
  %v64 = vsel %vm62, %v37, 0
  %v67 = vsel %vm62, %v38, 0
  %v70 = vsel %vm62, %v39, 0
  %v73 = vsel %vm62, %v40, 0
  %v76 = vsel %vm62, %v41, 0
  %v79 = vsel %vm62, %v42, 0
  %v82 = vsel %vm62, %v43, 0
  %v85 = vsel %vm62, %v44, 0
  %v88 = vsel %vm62, %v45, 0
  %v91 = vsel %vm62, %v46, 0
  %v94 = vsel %vm62, %v47, 0
  %v97 = vsel %vm62, %v48, 0
  %v100 = vsel %vm62, %v49, 0
  %v103 = vsel %vm62, %v50, 0
  %v106 = vsel %vm62, %v51, 0
  %v109 = vsel %vm62, %v52, 0
  %111 = vmatprep.subr.mxu0 0.0
  %112 = vmatpush1.msra.mxu0 %v53
  %113 = vmatprep.subr.mxu0 0.0
  %114 = vmatpush1.msra.mxu0 %v54
  %115 = vmatprep.subr.mxu0 0.0
  %116 = vmatpush1.msra.mxu0 0.0
  %117 = vmatprep.subr.mxu0 0.0
  %118 = vmatpush1.msra.mxu0 0.0
  %119 = vmatprep.subr.mxu0 0.0
  %120 = vmatpush1.msra.mxu0 0.0
  %121 = vmatprep.subr.mxu0 0.0
  %122 = vmatpush1.msra.mxu0 0.0
  %123 = vmatprep.subr.mxu0 0.0
  %124 = vmatpush1.msra.mxu0 0.0
  %125 = vmatprep.subr.mxu0 0.0
  %126 = vmatpush1.msra.mxu0 0.0
  %127 = vmatprep.subr.mxu0 0.0
  %128 = vmatpush1.msra.mxu0 0.0
  %129 = vmatprep.subr.mxu0 0.0
  %130 = vmatpush1.msra.mxu0 0.0
  %131 = vmatprep.subr.mxu0 0.0
  %132 = vmatpush1.msra.mxu0 0.0
  %133 = vmatprep.subr.mxu0 0.0
  %134 = vmatpush1.msra.mxu0 0.0
  %135 = vmatprep.subr.mxu0 0.0
  %136 = vmatpush1.msra.mxu0 0.0
  %137 = vmatprep.subr.mxu0 0.0
  %138 = vmatpush1.msra.mxu0 0.0
  %139 = vmatprep.subr.mxu0 0.0
  %140 = vmatpush1.msra.mxu0 0.0
  %141 = vmatprep.subr.mxu0 0.0
  %142 = vmatpush1.msra.mxu0 0.0
  %143 = vmatprep.subr.mxu0 0.0
  %144 = vmatpush1.msra.mxu0 0.0
  %145 = vmatprep.subr.mxu0 0.0
  %146 = vmatpush1.msra.mxu0 0.0
  %147 = vmatprep.subr.mxu0 0.0
  %148 = vmatpush1.msra.mxu0 0.0
  %149 = vmatprep.subr.mxu0 0.0
  %150 = vmatpush1.msra.mxu0 0.0
  %151 = vmatprep.subr.mxu0 0.0
  %152 = vmatpush1.msra.mxu0 0.0
  %153 = vmatprep.subr.mxu0 0.0
  %154 = vmatpush1.msra.mxu0 0.0
  %155 = vmatprep.subr.mxu0 0.0
  %156 = vmatpush1.msra.mxu0 0.0
  %157 = vmatprep.subr.mxu0 0.0
  %158 = vmatpush1.msra.mxu0 0.0
  %159 = vmatprep.subr.mxu0 0.0
  %160 = vmatpush1.msra.mxu0 0.0
  %161 = vmatprep.subr.mxu0 0.0
  %162 = vmatpush1.msra.mxu0 0.0
  %163 = vmatprep.subr.mxu0 0.0
  %164 = vmatpush1.msra.mxu0 0.0
  %165 = vmatprep.subr.mxu0 0.0
  %166 = vmatpush1.msra.mxu0 0.0
  %167 = vmatprep.subr.mxu0 0.0
  %168 = vmatpush1.msra.mxu0 0.0
  %169 = vmatprep.subr.mxu0 0.0
  %170 = vmatpush1.msra.mxu0 0.0
  %171 = vmatprep.subr.mxu0 0.0
  %172 = vmatpush1.msra.mxu0 0.0
  %173 = vmatprep.subr.mxu0 0.0
  %174 = vmatpush1.msra.mxu0 0.0
  %175 = vmatprep.mubr.f32.mxu0 0.0
  %176 = vmatmul.mubr.f32.gmra.mrb[0].mxu0 %v64
  %v177 = vpop.f32.mrb[0].mxu0
  %v178 = vadd.f32 %v60, %v177
  %v179 = vpop.f32.mrb[0].mxu0
  %180 = vmatprep.mubr.f32.mxu0 0.0
  %181 = vmatmul.mubr.f32.gmra.mrb[0].mxu0 %v67
  %v182 = vpop.f32.mrb[0].mxu0
  %v183 = vadd.f32 %v60, %v182
  %v184 = vpop.f32.mrb[0].mxu0
  %185 = vmatprep.mubr.f32.mxu0 0.0
  %186 = vmatmul.mubr.f32.gmra.mrb[0].mxu0 %v70
  %v187 = vpop.f32.mrb[0].mxu0
  %v188 = vadd.f32 %v60, %v187
  %v189 = vpop.f32.mrb[0].mxu0
  %190 = vmatprep.mubr.f32.mxu0 0.0
  %191 = vmatmul.mubr.f32.gmra.mrb[0].mxu0 %v73
  %v192 = vpop.f32.mrb[0].mxu0
  %v193 = vadd.f32 %v60, %v192
  %v194 = vpop.f32.mrb[0].mxu0
  %195 = vmatprep.mubr.f32.mxu0 0.0
  %196 = vmatmul.mubr.f32.gmra.mrb[0].mxu0 %v76
  %v197 = vpop.f32.mrb[0].mxu0
  %v198 = vadd.f32 %v60, %v197
  %v199 = vpop.f32.mrb[0].mxu0
  %200 = vmatprep.mubr.f32.mxu0 0.0
  %201 = vmatmul.mubr.f32.gmra.mrb[0].mxu0 %v79
  %v202 = vpop.f32.mrb[0].mxu0
  %v203 = vadd.f32 %v60, %v202
  %v204 = vpop.f32.mrb[0].mxu0
  %205 = vmatprep.mubr.f32.mxu0 0.0
  %206 = vmatmul.mubr.f32.gmra.mrb[0].mxu0 %v82
  %v207 = vpop.f32.mrb[0].mxu0
  %v208 = vadd.f32 %v60, %v207
  %v209 = vpop.f32.mrb[0].mxu0
  %210 = vmatprep.mubr.f32.mxu0 0.0
  %211 = vmatmul.mubr.f32.gmra.mrb[0].mxu0 %v85
  %v212 = vpop.f32.mrb[0].mxu0
  %v213 = vadd.f32 %v60, %v212
  %v214 = vpop.f32.mrb[0].mxu0
  %215 = vmatprep.mubr.f32.mxu0 0.0
  %216 = vmatmul.mubr.f32.gmra.mrb[0].mxu0 %v88
  %v217 = vpop.f32.mrb[0].mxu0
  %v218 = vadd.f32 %v60, %v217
  %v219 = vpop.f32.mrb[0].mxu0
  %220 = vmatprep.mubr.f32.mxu0 0.0
  %221 = vmatmul.mubr.f32.gmra.mrb[0].mxu0 %v91
  %v222 = vpop.f32.mrb[0].mxu0
  %v223 = vadd.f32 %v60, %v222
  %v224 = vpop.f32.mrb[0].mxu0
  %225 = vmatprep.mubr.f32.mxu0 0.0
  %226 = vmatmul.mubr.f32.gmra.mrb[0].mxu0 %v94
  %v227 = vpop.f32.mrb[0].mxu0
  %v228 = vadd.f32 %v60, %v227
  %v229 = vpop.f32.mrb[0].mxu0
  %230 = vmatprep.mubr.f32.mxu0 0.0
  %231 = vmatmul.mubr.f32.gmra.mrb[0].mxu0 %v97
  %v232 = vpop.f32.mrb[0].mxu0
  %v233 = vadd.f32 %v60, %v232
  %v234 = vpop.f32.mrb[0].mxu0
  %235 = vmatprep.mubr.f32.mxu0 0.0
  %236 = vmatmul.mubr.f32.gmra.mrb[0].mxu0 %v100
  %v237 = vpop.f32.mrb[0].mxu0
  %v238 = vadd.f32 %v60, %v237
  %v239 = vpop.f32.mrb[0].mxu0
  %240 = vmatprep.mubr.f32.mxu0 0.0
  %241 = vmatmul.mubr.f32.gmra.mrb[0].mxu0 %v103
  %v242 = vpop.f32.mrb[0].mxu0
  %v243 = vadd.f32 %v60, %v242
  %v244 = vpop.f32.mrb[0].mxu0
  %245 = vmatprep.mubr.f32.mxu0 0.0
  %246 = vmatmul.mubr.f32.gmra.mrb[0].mxu0 %v106
  %v247 = vpop.f32.mrb[0].mxu0
  %v248 = vadd.f32 %v60, %v247
  %v249 = vpop.f32.mrb[0].mxu0
  %250 = vmatprep.mubr.f32.mxu0 0.0
  %251 = vmatmul.mubr.f32.gmra.mrb[0].mxu0 %v109
  %v252 = vpop.f32.mrb[0].mxu0
  %v253 = vadd.f32 %v60, %v252
  %v254 = vpop.f32.mrb[0].mxu0
  %255 = vdwg.mxu0
  %v256 = vmax.f32 %v178, 0.0
  %v257 = vmax.f32 %v183, 0.0
  %v258 = vmax.f32 %v188, 0.0
  %v259 = vmax.f32 %v193, 0.0
  %v260 = vmax.f32 %v198, 0.0
  %v261 = vmax.f32 %v203, 0.0
  %v262 = vmax.f32 %v208, 0.0
  %v263 = vmax.f32 %v213, 0.0
  %v264 = vmax.f32 %v218, 0.0
  %v265 = vmax.f32 %v223, 0.0
  %v266 = vmax.f32 %v228, 0.0
  %v267 = vmax.f32 %v233, 0.0
  %v268 = vmax.f32 %v238, 0.0
  %v269 = vmax.f32 %v243, 0.0
  %v270 = vmax.f32 %v248, 0.0
  %v271 = vmax.f32 %v253, 0.0
  %v272 = vmul.f32 %v256, 0.3
  %v273 = vmul.f32 %v257, 0.3
  %v274 = vmul.f32 %v258, 0.3
  %v275 = vmul.f32 %v259, 0.3
  %v276 = vmul.f32 %v260, 0.3
  %v277 = vmul.f32 %v261, 0.3
  %v278 = vmul.f32 %v262, 0.3
  %v279 = vmul.f32 %v263, 0.3
  %v280 = vmul.f32 %v264, 0.3
  %v281 = vmul.f32 %v265, 0.3
  %v282 = vmul.f32 %v266, 0.3
  %v283 = vmul.f32 %v267, 0.3
  %v284 = vmul.f32 %v268, 0.3
  %v285 = vmul.f32 %v269, 0.3
  %v286 = vmul.f32 %v270, 0.3
  %v287 = vmul.f32 %v271, 0.3
  %v288 = vld [vmem:[%s3] sm:$0xf]
  %v289 = vld [vmem:[%s3 + $0x4] sm:$0xf]
  %v290 = vld [vmem:[%s3 + $0x8] sm:$0xf]
  %v291 = vld [vmem:[%s3 + $0xc] sm:$0xf]
  %v292 = vld [vmem:[%s3 + $0x10] sm:$0xf]
  %v293 = vld [vmem:[%s3 + $0x14] sm:$0xf]
  %v294 = vld [vmem:[%s3 + $0x18] sm:$0xf]
  %v295 = vld [vmem:[%s3 + $0x1c] sm:$0xf]
  %v296 = vld [vmem:[%s3 + $0x20] sm:$0xf]
  %v297 = vld [vmem:[%s3 + $0x24] sm:$0xf]
  %v298 = vld [vmem:[%s3 + $0x28] sm:$0xf]
  %v299 = vld [vmem:[%s3 + $0x2c] sm:$0xf]
  %v300 = vld [vmem:[%s3 + $0x30] sm:$0xf]
  %v301 = vld [vmem:[%s3 + $0x34] sm:$0xf]
  %v302 = vld [vmem:[%s3 + $0x38] sm:$0xf]
  %v303 = vld [vmem:[%s3 + $0x3c] sm:$0xf]
  %v304 = vpack.c.bf16 %v257, %v256
  %v305 = vpack.c.bf16 %v259, %v258
  %v306 = vpack.c.bf16 %v261, %v260
  %v307 = vpack.c.bf16 %v263, %v262
  %v308 = vpack.c.bf16 %v265, %v264
  %v309 = vpack.c.bf16 %v267, %v266
  %v310 = vpack.c.bf16 %v269, %v268
  %v311 = vpack.c.bf16 %v271, %v270
  %v312 = vld [vmem:[%s4] sm:$0xf]
  %v313 = vld [vmem:[%s4 + $0x4] sm:$0xf]
  %v314 = vld [vmem:[%s4 + $0x8] sm:$0xf]
  %v315 = vld [vmem:[%s4 + $0xc] sm:$0xf]
  %v320 = vunpack.c.l.b16 %v312
  %v321 = vunpack.c.l.b16 %v313
  %v322 = vunpack.c.l.b16 %v314
  %v323 = vunpack.c.l.b16 %v315
  %v324 = vpack.c.b16 %v321, %v320
  %v325 = vpack.c.b16 %v323, %v322
  %vm328 = vcmask 261120
  %v330 = vsel %vm328, %v304, 0
  %v333 = vsel %vm328, %v305, 0
  %v336 = vsel %vm328, %v306, 0
  %v339 = vsel %vm328, %v307, 0
  %v342 = vsel %vm328, %v308, 0
  %v345 = vsel %vm328, %v309, 0
  %v348 = vsel %vm328, %v310, 0
  %v351 = vsel %vm328, %v311, 0
  %353 = vmatprep.subr.bf16.mxu0 0
  %354 = vmatpush1.bf16.msra.mxu0 %v324
  %355 = vmatprep.subr.bf16.mxu0 0
  %356 = vmatpush1.bf16.msra.mxu0 %v325
  %357 = vmatprep.subr.bf16.mxu0 0
  %358 = vmatpush1.bf16.msra.mxu0 0
  %359 = vmatprep.subr.bf16.mxu0 0
  %360 = vmatpush1.bf16.msra.mxu0 0
  %361 = vmatprep.subr.bf16.mxu0 0
  %362 = vmatpush1.bf16.msra.mxu0 0
  %363 = vmatprep.subr.bf16.mxu0 0
  %364 = vmatpush1.bf16.msra.mxu0 0
  %365 = vmatprep.subr.bf16.mxu0 0
  %366 = vmatpush1.bf16.msra.mxu0 0
  %367 = vmatprep.subr.bf16.mxu0 0
  %368 = vmatpush1.bf16.msra.mxu0 0
  %369 = vmatprep.subr.bf16.mxu0 0
  %370 = vmatpush1.bf16.msra.mxu0 0
  %371 = vmatprep.subr.bf16.mxu0 0
  %372 = vmatpush1.bf16.msra.mxu0 0
  %373 = vmatprep.subr.bf16.mxu0 0
  %374 = vmatpush1.bf16.msra.mxu0 0
  %375 = vmatprep.subr.bf16.mxu0 0
  %376 = vmatpush1.bf16.msra.mxu0 0
  %377 = vmatprep.subr.bf16.mxu0 0
  %378 = vmatpush1.bf16.msra.mxu0 0
  %379 = vmatprep.subr.bf16.mxu0 0
  %380 = vmatpush1.bf16.msra.mxu0 0
  %381 = vmatprep.subr.bf16.mxu0 0
  %382 = vmatpush1.bf16.msra.mxu0 0
  %383 = vmatprep.subr.bf16.mxu0 0
  %384 = vmatpush1.bf16.msra.mxu0 0
  %385 = vmatprep.mubr.bf16.mxu0 0
  %386 = vmatmul.mubr.bf16.gmra.mrb[0].mxu0 %v330
  %v387 = vpop.f32.mrb[0].mxu0
  %v388 = vadd.f32 0.0, %v387
  %v389 = vpop.f32.mrb[0].mxu0
  %v390 = vpop.f32.mrb[0].mxu0
  %v391 = vadd.f32 0.0, %v390
  %v392 = vpop.f32.mrb[0].mxu0
  %393 = vmatprep.mubr.bf16.mxu0 0
  %394 = vmatmul.mubr.bf16.gmra.mrb[0].mxu0 %v333
  %v395 = vpop.f32.mrb[0].mxu0
  %v396 = vadd.f32 0.0, %v395
  %v397 = vpop.f32.mrb[0].mxu0
  %v398 = vpop.f32.mrb[0].mxu0
  %v399 = vadd.f32 0.0, %v398
  %v400 = vpop.f32.mrb[0].mxu0
  %401 = vmatprep.mubr.bf16.mxu0 0
  %402 = vmatmul.mubr.bf16.gmra.mrb[0].mxu0 %v336
  %v403 = vpop.f32.mrb[0].mxu0
  %v404 = vadd.f32 0.0, %v403
  %v405 = vpop.f32.mrb[0].mxu0
  %v406 = vpop.f32.mrb[0].mxu0
  %v407 = vadd.f32 0.0, %v406
  %v408 = vpop.f32.mrb[0].mxu0
  %409 = vmatprep.mubr.bf16.mxu0 0
  %410 = vmatmul.mubr.bf16.gmra.mrb[0].mxu0 %v339
  %v411 = vpop.f32.mrb[0].mxu0
  %v412 = vadd.f32 0.0, %v411
  %v413 = vpop.f32.mrb[0].mxu0
  %v414 = vpop.f32.mrb[0].mxu0
  %v415 = vadd.f32 0.0, %v414
  %v416 = vpop.f32.mrb[0].mxu0
  %417 = vmatprep.mubr.bf16.mxu0 0
  %418 = vmatmul.mubr.bf16.gmra.mrb[0].mxu0 %v342
  %v419 = vpop.f32.mrb[0].mxu0
  %v420 = vadd.f32 0.0, %v419
  %v421 = vpop.f32.mrb[0].mxu0
  %v422 = vpop.f32.mrb[0].mxu0
  %v423 = vadd.f32 0.0, %v422
  %v424 = vpop.f32.mrb[0].mxu0
  %425 = vmatprep.mubr.bf16.mxu0 0
  %426 = vmatmul.mubr.bf16.gmra.mrb[0].mxu0 %v345
  %v427 = vpop.f32.mrb[0].mxu0
  %v428 = vadd.f32 0.0, %v427
  %v429 = vpop.f32.mrb[0].mxu0
  %v430 = vpop.f32.mrb[0].mxu0
  %v431 = vadd.f32 0.0, %v430
  %v432 = vpop.f32.mrb[0].mxu0
  %433 = vmatprep.mubr.bf16.mxu0 0
  %434 = vmatmul.mubr.bf16.gmra.mrb[0].mxu0 %v348
  %v435 = vpop.f32.mrb[0].mxu0
  %v436 = vadd.f32 0.0, %v435
  %v437 = vpop.f32.mrb[0].mxu0
  %v438 = vpop.f32.mrb[0].mxu0
  %v439 = vadd.f32 0.0, %v438
  %v440 = vpop.f32.mrb[0].mxu0
  %441 = vmatprep.mubr.bf16.mxu0 0
  %442 = vmatmul.mubr.bf16.gmra.mrb[0].mxu0 %v351
  %v443 = vpop.f32.mrb[0].mxu0
  %v444 = vadd.f32 0.0, %v443
  %v445 = vpop.f32.mrb[0].mxu0
  %v446 = vpop.f32.mrb[0].mxu0
  %v447 = vadd.f32 0.0, %v446
  %v448 = vpop.f32.mrb[0].mxu0
  %449 = vdwg.mxu0
  %v450 = vld [vmem:[%s6] sm:$0x1]
  %v452 = vlaneseq
  %v453 = vshrl.u32 %v452, 7
  %v454 = vsub.s32 0, %v453
  %v455 = vrot.slane %v450, %v454
  %456 = vrot.lane.b32.xlu0 %v455, 64
  %v457 = vpop.permute.xlu0 %456
  %v459 = vadd.f32 %v388, %v457
  %v460 = vadd.f32 %v391, %v457
  %v461 = vadd.f32 %v396, %v457
  %v462 = vadd.f32 %v399, %v457
  %v463 = vadd.f32 %v404, %v457
  %v464 = vadd.f32 %v407, %v457
  %v465 = vadd.f32 %v412, %v457
  %v466 = vadd.f32 %v415, %v457
  %v467 = vadd.f32 %v420, %v457
  %v468 = vadd.f32 %v423, %v457
  %v469 = vadd.f32 %v428, %v457
  %v470 = vadd.f32 %v431, %v457
  %v471 = vadd.f32 %v436, %v457
  %v472 = vadd.f32 %v439, %v457
  %v473 = vadd.f32 %v444, %v457
  %v474 = vadd.f32 %v447, %v457
  %v475 = vpack.c.bf16 %v460, %v459
  %v476 = vpack.c.bf16 %v462, %v461
  %v477 = vpack.c.bf16 %v464, %v463
  %v478 = vpack.c.bf16 %v466, %v465
  %v479 = vpack.c.bf16 %v468, %v467
  %v480 = vpack.c.bf16 %v470, %v469
  %v481 = vpack.c.bf16 %v472, %v471
  %v482 = vpack.c.bf16 %v474, %v473
  %v483 = vld [vmem:[%s5] sm:$0xf]
  %v484 = vld [vmem:[%s5 + $0x4] sm:$0xf]
  %v485 = vld [vmem:[%s5 + $0x8] sm:$0xf]
  %v486 = vld [vmem:[%s5 + $0xc] sm:$0xf]
  %v491 = vunpack.c.l.b16 %v483
  %v492 = vunpack.c.l.b16 %v484
  %v493 = vunpack.c.l.b16 %v485
  %v494 = vunpack.c.l.b16 %v486
  %v495 = vpack.c.b16 %v492, %v491
  %v496 = vpack.c.b16 %v494, %v493
  %499 = vxpose.xlu0.c.b16.start [1/8] %v495, 128
  %500 = vxpose.xlu0.c.b16.cont [2/8] %v496, 128
  %501 = vxpose.xlu0.c.b16.cont [3/8] 0, 128
  %502 = vxpose.xlu0.c.b16.cont [4/8] 0, 128
  %503 = vxpose.xlu0.c.b16.cont [5/8] 0, 128
  %504 = vxpose.xlu0.c.b16.cont [6/8] 0, 128
  %505 = vxpose.xlu0.c.b16.cont [7/8] 0, 128
  %506 = vxpose.xlu0.c.b16.end [8/8] 0, 128
  %v507 = vpop.trf.xlu0
  %v508 = vpop.trf.xlu0
  %v509 = vpop.trf.xlu0
  %v510 = vpop.trf.xlu0
  %v511 = vpop.trf.xlu0
  %v512 = vpop.trf.xlu0
  %v513 = vpop.trf.xlu0
  %v514 = vpop.trf.xlu0
  %v516 = vsel %vm328, %v507, 0
  %518 = vmatprep.subr.bf16.mxu0 0
  %519 = vmatpush1.bf16.xpose.msra.mxu0 %v330
  %520 = vmatprep.subr.bf16.mxu0 0
  %521 = vmatpush1.bf16.xpose.msra.mxu0 %v333
  %522 = vmatprep.subr.bf16.mxu0 0
  %523 = vmatpush1.bf16.xpose.msra.mxu0 %v336
  %524 = vmatprep.subr.bf16.mxu0 0
  %525 = vmatpush1.bf16.xpose.msra.mxu0 %v339
  %526 = vmatprep.subr.bf16.mxu0 0
  %527 = vmatpush1.bf16.xpose.msra.mxu0 %v342
  %528 = vmatprep.subr.bf16.mxu0 0
  %529 = vmatpush1.bf16.xpose.msra.mxu0 %v345
  %530 = vmatprep.subr.bf16.mxu0 0
  %531 = vmatpush1.bf16.xpose.msra.mxu0 %v348
  %532 = vmatprep.subr.bf16.mxu0 0
  %533 = vmatpush1.bf16.xpose.msra.mxu0 %v351
  %534 = vmatprep.subr.bf16.mxu0 0
  %535 = vmatpush1.bf16.xpose.msra.mxu0 0
  %536 = vmatprep.subr.bf16.mxu0 0
  %537 = vmatpush1.bf16.xpose.msra.mxu0 0
  %538 = vmatprep.subr.bf16.mxu0 0
  %539 = vmatpush1.bf16.xpose.msra.mxu0 0
  %540 = vmatprep.subr.bf16.mxu0 0
  %541 = vmatpush1.bf16.xpose.msra.mxu0 0
  %542 = vmatprep.subr.bf16.mxu0 0
  %543 = vmatpush1.bf16.xpose.msra.mxu0 0
  %544 = vmatprep.subr.bf16.mxu0 0
  %545 = vmatpush1.bf16.xpose.msra.mxu0 0
  %546 = vmatprep.subr.bf16.mxu0 0
  %547 = vmatpush1.bf16.xpose.msra.mxu0 0
  %548 = vmatprep.subr.bf16.mxu0 0
  %549 = vmatpush1.bf16.xpose.msra.mxu0 0
  %550 = vmatprep.mubr.bf16.mxu0 0
  %551 = vmatmul.mubr.bf16.gmra.mrb[0].mxu0 %v516
  %v552 = vpop.f32.mrb[0].mxu0
  %v553 = vadd.f32 0.0, %v552
  %v554 = vpop.f32.mrb[0].mxu0
  %v555 = vpop.f32.mrb[0].mxu0
  %v556 = vpop.f32.mrb[0].mxu0
  %557 = vdwg.mxu0
  %v558 = vpack.c.bf16 %v553, %v553
  %560 = vset.pattern.permute.xlu0 64
  %561 = vperm.xlu0 %560, %v475
  %v562 = vpop.permute.xlu0 %561
  %565 = vset.pattern.permute.xlu0 64
  %566 = vperm.xlu0 %565, %v476
  %v567 = vpop.permute.xlu0 %566
  %570 = vset.pattern.permute.xlu0 64
  %571 = vperm.xlu0 %570, %v477
  %v572 = vpop.permute.xlu0 %571
  %575 = vset.pattern.permute.xlu0 64
  %576 = vperm.xlu0 %575, %v478
  %v577 = vpop.permute.xlu0 %576
  %580 = vset.pattern.permute.xlu0 64
  %581 = vperm.xlu0 %580, %v479
  %v582 = vpop.permute.xlu0 %581
  %585 = vset.pattern.permute.xlu0 64
  %586 = vperm.xlu0 %585, %v480
  %v587 = vpop.permute.xlu0 %586
  %590 = vset.pattern.permute.xlu0 64
  %591 = vperm.xlu0 %590, %v481
  %v592 = vpop.permute.xlu0 %591
  %595 = vset.pattern.permute.xlu0 64
  %596 = vperm.xlu0 %595, %v482
  %v597 = vpop.permute.xlu0 %596
  %v600 = vpack.i.b16 %v558, %v558
  %v602 = vlaneseq
  %v603 = vshrl.u32 %v602, 7
  %v604 = vsub.s32 0, %v603
  %v605 = vrot.slane %v600, %v604
  %v606 = vadd.bf16 %v562, %v605
  %v607 = vadd.bf16 %v567, %v605
  %v608 = vadd.bf16 %v572, %v605
  %v609 = vadd.bf16 %v577, %v605
  %v610 = vadd.bf16 %v582, %v605
  %v611 = vadd.bf16 %v587, %v605
  %v612 = vadd.bf16 %v592, %v605
  %v613 = vadd.bf16 %v597, %v605
  %614 = vset.pattern.permute.xlu0 65
  %615 = vperm.xlu0 %614, %v475
  %v616 = vpop.permute.xlu0 %615
  %618 = vset.pattern.permute.xlu0 65
  %619 = vperm.xlu0 %618, %v476
  %v620 = vpop.permute.xlu0 %619
  %622 = vset.pattern.permute.xlu0 65
  %623 = vperm.xlu0 %622, %v477
  %v624 = vpop.permute.xlu0 %623
  %626 = vset.pattern.permute.xlu0 65
  %627 = vperm.xlu0 %626, %v478
  %v628 = vpop.permute.xlu0 %627
  %630 = vset.pattern.permute.xlu0 65
  %631 = vperm.xlu0 %630, %v479
  %v632 = vpop.permute.xlu0 %631
  %634 = vset.pattern.permute.xlu0 65
  %635 = vperm.xlu0 %634, %v480
  %v636 = vpop.permute.xlu0 %635
  %638 = vset.pattern.permute.xlu0 65
  %639 = vperm.xlu0 %638, %v481
  %v640 = vpop.permute.xlu0 %639
  %642 = vset.pattern.permute.xlu0 65
  %643 = vperm.xlu0 %642, %v482
  %v644 = vpop.permute.xlu0 %643
  %v646 = vshrl.u32 %v558, 16
  %v647 = vpack.i.b16 %v646, %v646
  %v649 = vlaneseq
  %v650 = vshrl.u32 %v649, 7
  %v651 = vsub.s32 0, %v650
  %v652 = vrot.slane %v647, %v651
  %v653 = vadd.bf16 %v616, %v652
  %v654 = vadd.bf16 %v620, %v652
  %v655 = vadd.bf16 %v624, %v652
  %v656 = vadd.bf16 %v628, %v652
  %v657 = vadd.bf16 %v632, %v652
  %v658 = vadd.bf16 %v636, %v652
  %v659 = vadd.bf16 %v640, %v652
  %v660 = vadd.bf16 %v644, %v652
  %v677 = vunpack.c.l.b16 %v288
  %v678 = vunpack.c.l.b16 %v289
  %v679 = vunpack.c.l.b16 %v290
  %v680 = vunpack.c.l.b16 %v291
  %v681 = vunpack.c.l.b16 %v292
  %v682 = vunpack.c.l.b16 %v293
  %v683 = vunpack.c.l.b16 %v294
  %v684 = vunpack.c.l.b16 %v295
  %v685 = vunpack.c.l.b16 %v296
  %v686 = vunpack.c.l.b16 %v297
  %v687 = vunpack.c.l.b16 %v298
  %v688 = vunpack.c.l.b16 %v299
  %v689 = vunpack.c.l.b16 %v300
  %v690 = vunpack.c.l.b16 %v301
  %v691 = vunpack.c.l.b16 %v302
  %v692 = vunpack.c.l.b16 %v303
  %v693 = vpack.c.b16 %v678, %v677
  %v694 = vpack.c.b16 %v680, %v679
  %v695 = vpack.c.b16 %v682, %v681
  %v696 = vpack.c.b16 %v684, %v683
  %v697 = vpack.c.b16 %v686, %v685
  %v698 = vpack.c.b16 %v688, %v687
  %v699 = vpack.c.b16 %v690, %v689
  %v700 = vpack.c.b16 %v692, %v691
  %v709 = vmul.bf16 %v606, %v693
  %v710 = vmul.bf16 %v607, %v694
  %v711 = vmul.bf16 %v608, %v695
  %v712 = vmul.bf16 %v609, %v696
  %v713 = vmul.bf16 %v610, %v697
  %v714 = vmul.bf16 %v611, %v698
  %v715 = vmul.bf16 %v612, %v699
  %v716 = vmul.bf16 %v613, %v700
  %v717 = vmul.bf16 %v709, 3204497152
  %v718 = vmul.bf16 %v710, 3204497152
  %v719 = vmul.bf16 %v711, 3204497152
  %v720 = vmul.bf16 %v712, 3204497152
  %v721 = vmul.bf16 %v713, 3204497152
  %v722 = vmul.bf16 %v714, 3204497152
  %v723 = vmul.bf16 %v715, 3204497152
  %v724 = vmul.bf16 %v716, 3204497152
  %v725 = vmax.bf16 %v709, %v717
  %v726 = vmax.bf16 %v710, %v718
  %v727 = vmax.bf16 %v711, %v719
  %v728 = vmax.bf16 %v712, %v720
  %v729 = vmax.bf16 %v713, %v721
  %v730 = vmax.bf16 %v714, %v722
  %v731 = vmax.bf16 %v715, %v723
  %v732 = vmax.bf16 %v716, %v724
  %v733 = vmul.bf16 %v653, %v693
  %v734 = vmul.bf16 %v654, %v694
  %v735 = vmul.bf16 %v655, %v695
  %v736 = vmul.bf16 %v656, %v696
  %v737 = vmul.bf16 %v657, %v697
  %v738 = vmul.bf16 %v658, %v698
  %v739 = vmul.bf16 %v659, %v699
  %v740 = vmul.bf16 %v660, %v700
  %v741 = vmul.bf16 %v733, 3204497152
  %v742 = vmul.bf16 %v734, 3204497152
  %v743 = vmul.bf16 %v735, 3204497152
  %v744 = vmul.bf16 %v736, 3204497152
  %v745 = vmul.bf16 %v737, 3204497152
  %v746 = vmul.bf16 %v738, 3204497152
  %v747 = vmul.bf16 %v739, 3204497152
  %v748 = vmul.bf16 %v740, 3204497152
  %v749 = vmax.bf16 %v733, %v741
  %v750 = vmax.bf16 %v734, %v742
  %v751 = vmax.bf16 %v735, %v743
  %v752 = vmax.bf16 %v736, %v744
  %v753 = vmax.bf16 %v737, %v745
  %v754 = vmax.bf16 %v738, %v746
  %v755 = vmax.bf16 %v739, %v747
  %v756 = vmax.bf16 %v740, %v748
  %v757 = vpack.c.bf16 %v391, %v388
  %v758 = vpack.c.bf16 %v399, %v396
  %v759 = vpack.c.bf16 %v407, %v404
  %v760 = vpack.c.bf16 %v415, %v412
  %v761 = vpack.c.bf16 %v423, %v420
  %v762 = vpack.c.bf16 %v431, %v428
  %v763 = vpack.c.bf16 %v439, %v436
  %v764 = vpack.c.bf16 %v447, %v444
  %v765 = vsub.f32 0.0, %v388
  %v766 = vsub.f32 0.0, %v391
  %v767 = vsub.f32 0.0, %v396
  %v768 = vsub.f32 0.0, %v399
  %v769 = vsub.f32 0.0, %v404
  %v770 = vsub.f32 0.0, %v407
  %v771 = vsub.f32 0.0, %v412
  %v772 = vsub.f32 0.0, %v415
  %v773 = vsub.f32 0.0, %v420
  %v774 = vsub.f32 0.0, %v423
  %v775 = vsub.f32 0.0, %v428
  %v776 = vsub.f32 0.0, %v431
  %v777 = vsub.f32 0.0, %v436
  %v778 = vsub.f32 0.0, %v439
  %v779 = vsub.f32 0.0, %v444
  %v780 = vsub.f32 0.0, %v447
  %v781 = vpack.c.bf16 %v766, %v765
  %v782 = vpack.c.bf16 %v768, %v767
  %v783 = vpack.c.bf16 %v770, %v769
  %v784 = vpack.c.bf16 %v772, %v771
  %v785 = vpack.c.bf16 %v774, %v773
  %v786 = vpack.c.bf16 %v776, %v775
  %v787 = vpack.c.bf16 %v778, %v777
  %v788 = vpack.c.bf16 %v780, %v779
  %797 = vrot.lane.b32.xlu0 %v781, 96
  %v798 = vpop.permute.xlu0 %797
  %799 = vrot.lane.b32.xlu0 %v782, 96
  %v800 = vpop.permute.xlu0 %799
  %801 = vrot.lane.b32.xlu0 %v783, 96
  %v802 = vpop.permute.xlu0 %801
  %803 = vrot.lane.b32.xlu0 %v784, 96
  %v804 = vpop.permute.xlu0 %803
  %805 = vrot.lane.b32.xlu0 %v785, 96
  %v806 = vpop.permute.xlu0 %805
  %807 = vrot.lane.b32.xlu0 %v786, 96
  %v808 = vpop.permute.xlu0 %807
  %809 = vrot.lane.b32.xlu0 %v787, 96
  %v810 = vpop.permute.xlu0 %809
  %811 = vrot.lane.b32.xlu0 %v788, 96
  %v812 = vpop.permute.xlu0 %811
  %821 = vmatprep.subr.bf16.mxu0 0
  %822 = vmatpush1.bf16.msra.mxu0 %v757
  %823 = vmatprep.subr.bf16.mxu0 0
  %824 = vmatpush1.bf16.msra.mxu0 %v758
  %825 = vmatprep.subr.bf16.mxu0 0
  %826 = vmatpush1.bf16.msra.mxu0 %v759
  %827 = vmatprep.subr.bf16.mxu0 0
  %828 = vmatpush1.bf16.msra.mxu0 %v760
  %829 = vmatprep.subr.bf16.mxu0 0
  %830 = vmatpush1.bf16.msra.mxu0 %v761
  %831 = vmatprep.subr.bf16.mxu0 0
  %832 = vmatpush1.bf16.msra.mxu0 %v762
  %833 = vmatprep.subr.bf16.mxu0 0
  %834 = vmatpush1.bf16.msra.mxu0 %v763
  %835 = vmatprep.subr.bf16.mxu0 0
  %836 = vmatpush1.bf16.msra.mxu0 %v764
  %837 = vmatprep.subr.bf16.mxu0 0
  %838 = vmatpush1.bf16.msra.mxu0 %v798
  %839 = vmatprep.subr.bf16.mxu0 0
  %840 = vmatpush1.bf16.msra.mxu0 %v800
  %841 = vmatprep.subr.bf16.mxu0 0
  %842 = vmatpush1.bf16.msra.mxu0 %v802
  %843 = vmatprep.subr.bf16.mxu0 0
  %844 = vmatpush1.bf16.msra.mxu0 %v804
  %845 = vmatprep.subr.bf16.mxu0 0
  %846 = vmatpush1.bf16.msra.mxu0 %v806
  %847 = vmatprep.subr.bf16.mxu0 0
  %848 = vmatpush1.bf16.msra.mxu0 %v808
  %849 = vmatprep.subr.bf16.mxu0 0
  %850 = vmatpush1.bf16.msra.mxu0 %v810
  %851 = vmatprep.subr.bf16.mxu0 0
  %852 = vmatpush1.bf16.msra.mxu0 %v812
  %853 = vmatprep.mubr.bf16.mxu0 %v749
  %854 = vmatmul.mubr.bf16.gmra.mrb[0].mxu0 %v725
  %v855 = vpop.f32.mrb[0].mxu0
  %v856 = vadd.f32 0.0, %v855
  %v857 = vpop.f32.mrb[0].mxu0
  %v858 = vpop.f32.mrb[0].mxu0
  %v859 = vadd.f32 0.0, %v858
  %v860 = vpop.f32.mrb[0].mxu0
  %861 = vmatprep.mubr.bf16.mxu0 %v750
  %862 = vmatmul.mubr.bf16.gmra.mrb[0].mxu0 %v726
  %v863 = vpop.f32.mrb[0].mxu0
  %v864 = vadd.f32 0.0, %v863
  %v865 = vpop.f32.mrb[0].mxu0
  %v866 = vpop.f32.mrb[0].mxu0
  %v867 = vadd.f32 0.0, %v866
  %v868 = vpop.f32.mrb[0].mxu0
  %869 = vmatprep.mubr.bf16.mxu0 %v751
  %870 = vmatmul.mubr.bf16.gmra.mrb[0].mxu0 %v727
  %v871 = vpop.f32.mrb[0].mxu0
  %v872 = vadd.f32 0.0, %v871
  %v873 = vpop.f32.mrb[0].mxu0
  %v874 = vpop.f32.mrb[0].mxu0
  %v875 = vadd.f32 0.0, %v874
  %v876 = vpop.f32.mrb[0].mxu0
  %877 = vmatprep.mubr.bf16.mxu0 %v752
  %878 = vmatmul.mubr.bf16.gmra.mrb[0].mxu0 %v728
  %v879 = vpop.f32.mrb[0].mxu0
  %v880 = vadd.f32 0.0, %v879
  %v881 = vpop.f32.mrb[0].mxu0
  %v882 = vpop.f32.mrb[0].mxu0
  %v883 = vadd.f32 0.0, %v882
  %v884 = vpop.f32.mrb[0].mxu0
  %885 = vmatprep.mubr.bf16.mxu0 %v753
  %886 = vmatmul.mubr.bf16.gmra.mrb[0].mxu0 %v729
  %v887 = vpop.f32.mrb[0].mxu0
  %v888 = vadd.f32 0.0, %v887
  %v889 = vpop.f32.mrb[0].mxu0
  %v890 = vpop.f32.mrb[0].mxu0
  %v891 = vadd.f32 0.0, %v890
  %v892 = vpop.f32.mrb[0].mxu0
  %893 = vmatprep.mubr.bf16.mxu0 %v754
  %894 = vmatmul.mubr.bf16.gmra.mrb[0].mxu0 %v730
  %v895 = vpop.f32.mrb[0].mxu0
  %v896 = vadd.f32 0.0, %v895
  %v897 = vpop.f32.mrb[0].mxu0
  %v898 = vpop.f32.mrb[0].mxu0
  %v899 = vadd.f32 0.0, %v898
  %v900 = vpop.f32.mrb[0].mxu0
  %901 = vmatprep.mubr.bf16.mxu0 %v755
  %902 = vmatmul.mubr.bf16.gmra.mrb[0].mxu0 %v731
  %v903 = vpop.f32.mrb[0].mxu0
  %v904 = vadd.f32 0.0, %v903
  %v905 = vpop.f32.mrb[0].mxu0
  %v906 = vpop.f32.mrb[0].mxu0
  %v907 = vadd.f32 0.0, %v906
  %v908 = vpop.f32.mrb[0].mxu0
  %909 = vmatprep.mubr.bf16.mxu0 %v756
  %910 = vmatmul.mubr.bf16.gmra.mrb[0].mxu0 %v732
  %v911 = vpop.f32.mrb[0].mxu0
  %v912 = vadd.f32 0.0, %v911
  %v913 = vpop.f32.mrb[0].mxu0
  %v914 = vpop.f32.mrb[0].mxu0
  %v915 = vadd.f32 0.0, %v914
  %v916 = vpop.f32.mrb[0].mxu0
  %917 = vdwg.mxu0
  %v918 = vadd.f32 %v272, %v856
  %v919 = vadd.f32 %v273, %v859
  %v920 = vadd.f32 %v274, %v864
  %v921 = vadd.f32 %v275, %v867
  %v922 = vadd.f32 %v276, %v872
  %v923 = vadd.f32 %v277, %v875
  %v924 = vadd.f32 %v278, %v880
  %v925 = vadd.f32 %v279, %v883
  %v926 = vadd.f32 %v280, %v888
  %v927 = vadd.f32 %v281, %v891
  %v928 = vadd.f32 %v282, %v896
  %v929 = vadd.f32 %v283, %v899
  %v930 = vadd.f32 %v284, %v904
  %v931 = vadd.f32 %v285, %v907
  %v932 = vadd.f32 %v286, %v912
  %v933 = vadd.f32 %v287, %v915
  %v934 = vld [vmem:[%s7] sm:$0x1]
  %v936 = vlaneseq
  %v937 = vshrl.u32 %v936, 7
  %v938 = vsub.s32 0, %v937
  %v939 = vrot.slane %v934, %v938
  %v941 = vadd.f32 %v918, %v939
  %v942 = vadd.f32 %v919, %v939
  %v943 = vadd.f32 %v920, %v939
  %v944 = vadd.f32 %v921, %v939
  %v945 = vadd.f32 %v922, %v939
  %v946 = vadd.f32 %v923, %v939
  %v947 = vadd.f32 %v924, %v939
  %v948 = vadd.f32 %v925, %v939
  %v949 = vadd.f32 %v926, %v939
  %v950 = vadd.f32 %v927, %v939
  %v951 = vadd.f32 %v928, %v939
  %v952 = vadd.f32 %v929, %v939
  %v953 = vadd.f32 %v930, %v939
  %v954 = vadd.f32 %v931, %v939
  %v955 = vadd.f32 %v932, %v939
  %v956 = vadd.f32 %v933, %v939
  %v957 = vpack.c.bf16 %v942, %v941
  %v958 = vpack.c.bf16 %v944, %v943
  %v959 = vpack.c.bf16 %v946, %v945
  %v960 = vpack.c.bf16 %v948, %v947
  %v961 = vpack.c.bf16 %v950, %v949
  %v962 = vpack.c.bf16 %v952, %v951
  %v963 = vpack.c.bf16 %v954, %v953
  %v964 = vpack.c.bf16 %v956, %v955
  %s965 = scalar_lea.vmem %s4, 16
  %v966 = vld [vmem:[%s965] sm:$0xf]
  %v967 = vld [vmem:[%s965 + $0x4] sm:$0xf]
  %v968 = vld [vmem:[%s965 + $0x8] sm:$0xf]
  %v969 = vld [vmem:[%s965 + $0xc] sm:$0xf]
  %v974 = vunpack.c.l.b16 %v966
  %v975 = vunpack.c.l.b16 %v967
  %v976 = vunpack.c.l.b16 %v968
  %v977 = vunpack.c.l.b16 %v969
  %v978 = vpack.c.b16 %v975, %v974
  %v979 = vpack.c.b16 %v977, %v976
  %v983 = vsel %vm328, %v957, 0
  %v986 = vsel %vm328, %v958, 0
  %v989 = vsel %vm328, %v959, 0
  %v992 = vsel %vm328, %v960, 0
  %v995 = vsel %vm328, %v961, 0
  %v998 = vsel %vm328, %v962, 0
  %v1001 = vsel %vm328, %v963, 0
  %v1004 = vsel %vm328, %v964, 0
  %1006 = vmatprep.subr.bf16.mxu0 0
  %1007 = vmatpush1.bf16.msra.mxu0 %v978
  %1008 = vmatprep.subr.bf16.mxu0 0
  %1009 = vmatpush1.bf16.msra.mxu0 %v979
  %1010 = vmatprep.subr.bf16.mxu0 0
  %1011 = vmatpush1.bf16.msra.mxu0 0
  %1012 = vmatprep.subr.bf16.mxu0 0
  %1013 = vmatpush1.bf16.msra.mxu0 0
  %1014 = vmatprep.subr.bf16.mxu0 0
  %1015 = vmatpush1.bf16.msra.mxu0 0
  %1016 = vmatprep.subr.bf16.mxu0 0
  %1017 = vmatpush1.bf16.msra.mxu0 0
  %1018 = vmatprep.subr.bf16.mxu0 0
  %1019 = vmatpush1.bf16.msra.mxu0 0
  %1020 = vmatprep.subr.bf16.mxu0 0
  %1021 = vmatpush1.bf16.msra.mxu0 0
  %1022 = vmatprep.subr.bf16.mxu0 0
  %1023 = vmatpush1.bf16.msra.mxu0 0
  %1024 = vmatprep.subr.bf16.mxu0 0
  %1025 = vmatpush1.bf16.msra.mxu0 0
  %1026 = vmatprep.subr.bf16.mxu0 0
  %1027 = vmatpush1.bf16.msra.mxu0 0
  %1028 = vmatprep.subr.bf16.mxu0 0
  %1029 = vmatpush1.bf16.msra.mxu0 0
  %1030 = vmatprep.subr.bf16.mxu0 0
  %1031 = vmatpush1.bf16.msra.mxu0 0
  %1032 = vmatprep.subr.bf16.mxu0 0
  %1033 = vmatpush1.bf16.msra.mxu0 0
  %1034 = vmatprep.subr.bf16.mxu0 0
  %1035 = vmatpush1.bf16.msra.mxu0 0
  %1036 = vmatprep.subr.bf16.mxu0 0
  %1037 = vmatpush1.bf16.msra.mxu0 0
  %1038 = vmatprep.mubr.bf16.mxu0 0
  %1039 = vmatmul.mubr.bf16.gmra.mrb[0].mxu0 %v983
  %v1040 = vpop.f32.mrb[0].mxu0
  %v1041 = vadd.f32 0.0, %v1040
  %v1042 = vpop.f32.mrb[0].mxu0
  %v1043 = vpop.f32.mrb[0].mxu0
  %v1044 = vadd.f32 0.0, %v1043
  %v1045 = vpop.f32.mrb[0].mxu0
  %1046 = vmatprep.mubr.bf16.mxu0 0
  %1047 = vmatmul.mubr.bf16.gmra.mrb[0].mxu0 %v986
  %v1048 = vpop.f32.mrb[0].mxu0
  %v1049 = vadd.f32 0.0, %v1048
  %v1050 = vpop.f32.mrb[0].mxu0
  %v1051 = vpop.f32.mrb[0].mxu0
  %v1052 = vadd.f32 0.0, %v1051
  %v1053 = vpop.f32.mrb[0].mxu0
  %1054 = vmatprep.mubr.bf16.mxu0 0
  %1055 = vmatmul.mubr.bf16.gmra.mrb[0].mxu0 %v989
  %v1056 = vpop.f32.mrb[0].mxu0
  %v1057 = vadd.f32 0.0, %v1056
  %v1058 = vpop.f32.mrb[0].mxu0
  %v1059 = vpop.f32.mrb[0].mxu0
  %v1060 = vadd.f32 0.0, %v1059
  %v1061 = vpop.f32.mrb[0].mxu0
  %1062 = vmatprep.mubr.bf16.mxu0 0
  %1063 = vmatmul.mubr.bf16.gmra.mrb[0].mxu0 %v992
  %v1064 = vpop.f32.mrb[0].mxu0
  %v1065 = vadd.f32 0.0, %v1064
  %v1066 = vpop.f32.mrb[0].mxu0
  %v1067 = vpop.f32.mrb[0].mxu0
  %v1068 = vadd.f32 0.0, %v1067
  %v1069 = vpop.f32.mrb[0].mxu0
  %1070 = vmatprep.mubr.bf16.mxu0 0
  %1071 = vmatmul.mubr.bf16.gmra.mrb[0].mxu0 %v995
  %v1072 = vpop.f32.mrb[0].mxu0
  %v1073 = vadd.f32 0.0, %v1072
  %v1074 = vpop.f32.mrb[0].mxu0
  %v1075 = vpop.f32.mrb[0].mxu0
  %v1076 = vadd.f32 0.0, %v1075
  %v1077 = vpop.f32.mrb[0].mxu0
  %1078 = vmatprep.mubr.bf16.mxu0 0
  %1079 = vmatmul.mubr.bf16.gmra.mrb[0].mxu0 %v998
  %v1080 = vpop.f32.mrb[0].mxu0
  %v1081 = vadd.f32 0.0, %v1080
  %v1082 = vpop.f32.mrb[0].mxu0
  %v1083 = vpop.f32.mrb[0].mxu0
  %v1084 = vadd.f32 0.0, %v1083
  %v1085 = vpop.f32.mrb[0].mxu0
  %1086 = vmatprep.mubr.bf16.mxu0 0
  %1087 = vmatmul.mubr.bf16.gmra.mrb[0].mxu0 %v1001
  %v1088 = vpop.f32.mrb[0].mxu0
  %v1089 = vadd.f32 0.0, %v1088
  %v1090 = vpop.f32.mrb[0].mxu0
  %v1091 = vpop.f32.mrb[0].mxu0
  %v1092 = vadd.f32 0.0, %v1091
  %v1093 = vpop.f32.mrb[0].mxu0
  %1094 = vmatprep.mubr.bf16.mxu0 0
  %1095 = vmatmul.mubr.bf16.gmra.mrb[0].mxu0 %v1004
  %v1096 = vpop.f32.mrb[0].mxu0
  %v1097 = vadd.f32 0.0, %v1096
  %v1098 = vpop.f32.mrb[0].mxu0
  %v1099 = vpop.f32.mrb[0].mxu0
  %v1100 = vadd.f32 0.0, %v1099
  %v1101 = vpop.f32.mrb[0].mxu0
  %1102 = vdwg.mxu0
  %s1103 = scalar_lea.vmem %s6, 1
  %v1104 = vld [vmem:[%s1103] sm:$0x1]
  %v1106 = vlaneseq
  %v1107 = vshrl.u32 %v1106, 7
  %v1108 = vsub.s32 0, %v1107
  %v1109 = vrot.slane %v1104, %v1108
  %1110 = vrot.lane.b32.xlu0 %v1109, 64
  %v1111 = vpop.permute.xlu0 %1110
  %v1113 = vadd.f32 %v1041, %v1111
  %v1114 = vadd.f32 %v1044, %v1111
  %v1115 = vadd.f32 %v1049, %v1111
  %v1116 = vadd.f32 %v1052, %v1111
  %v1117 = vadd.f32 %v1057, %v1111
  %v1118 = vadd.f32 %v1060, %v1111
  %v1119 = vadd.f32 %v1065, %v1111
  %v1120 = vadd.f32 %v1068, %v1111
  %v1121 = vadd.f32 %v1073, %v1111
  %v1122 = vadd.f32 %v1076, %v1111
  %v1123 = vadd.f32 %v1081, %v1111
  %v1124 = vadd.f32 %v1084, %v1111
  %v1125 = vadd.f32 %v1089, %v1111
  %v1126 = vadd.f32 %v1092, %v1111
  %v1127 = vadd.f32 %v1097, %v1111
  %v1128 = vadd.f32 %v1100, %v1111
  %v1129 = vpack.c.bf16 %v1114, %v1113
  %v1130 = vpack.c.bf16 %v1116, %v1115
  %v1131 = vpack.c.bf16 %v1118, %v1117
  %v1132 = vpack.c.bf16 %v1120, %v1119
  %v1133 = vpack.c.bf16 %v1122, %v1121
  %v1134 = vpack.c.bf16 %v1124, %v1123
  %v1135 = vpack.c.bf16 %v1126, %v1125
  %v1136 = vpack.c.bf16 %v1128, %v1127
  %s1137 = scalar_lea.vmem %s5, 16
  %v1138 = vld [vmem:[%s1137] sm:$0xf]
  %v1139 = vld [vmem:[%s1137 + $0x4] sm:$0xf]
  %v1140 = vld [vmem:[%s1137 + $0x8] sm:$0xf]
  %v1141 = vld [vmem:[%s1137 + $0xc] sm:$0xf]
  %v1146 = vunpack.c.l.b16 %v1138
  %v1147 = vunpack.c.l.b16 %v1139
  %v1148 = vunpack.c.l.b16 %v1140
  %v1149 = vunpack.c.l.b16 %v1141
  %v1150 = vpack.c.b16 %v1147, %v1146
  %v1151 = vpack.c.b16 %v1149, %v1148
  %1154 = vxpose.xlu0.c.b16.start [1/8] %v1150, 128
  %1155 = vxpose.xlu0.c.b16.cont [2/8] %v1151, 128
  %1156 = vxpose.xlu0.c.b16.cont [3/8] 0, 128
  %1157 = vxpose.xlu0.c.b16.cont [4/8] 0, 128
  %1158 = vxpose.xlu0.c.b16.cont [5/8] 0, 128
  %1159 = vxpose.xlu0.c.b16.cont [6/8] 0, 128
  %1160 = vxpose.xlu0.c.b16.cont [7/8] 0, 128
  %1161 = vxpose.xlu0.c.b16.end [8/8] 0, 128
  %v1162 = vpop.trf.xlu0
  %v1163 = vpop.trf.xlu0
  %v1164 = vpop.trf.xlu0
  %v1165 = vpop.trf.xlu0
  %v1166 = vpop.trf.xlu0
  %v1167 = vpop.trf.xlu0
  %v1168 = vpop.trf.xlu0
  %v1169 = vpop.trf.xlu0
  %v1171 = vsel %vm328, %v1162, 0
  %1173 = vmatprep.subr.bf16.mxu0 0
  %1174 = vmatpush1.bf16.xpose.msra.mxu0 %v983
  %1175 = vmatprep.subr.bf16.mxu0 0
  %1176 = vmatpush1.bf16.xpose.msra.mxu0 %v986
  %1177 = vmatprep.subr.bf16.mxu0 0
  %1178 = vmatpush1.bf16.xpose.msra.mxu0 %v989
  %1179 = vmatprep.subr.bf16.mxu0 0
  %1180 = vmatpush1.bf16.xpose.msra.mxu0 %v992
  %1181 = vmatprep.subr.bf16.mxu0 0
  %1182 = vmatpush1.bf16.xpose.msra.mxu0 %v995
  %1183 = vmatprep.subr.bf16.mxu0 0
  %1184 = vmatpush1.bf16.xpose.msra.mxu0 %v998
  %1185 = vmatprep.subr.bf16.mxu0 0
  %1186 = vmatpush1.bf16.xpose.msra.mxu0 %v1001
  %1187 = vmatprep.subr.bf16.mxu0 0
  %1188 = vmatpush1.bf16.xpose.msra.mxu0 %v1004
  %1189 = vmatprep.subr.bf16.mxu0 0
  %1190 = vmatpush1.bf16.xpose.msra.mxu0 0
  %1191 = vmatprep.subr.bf16.mxu0 0
  %1192 = vmatpush1.bf16.xpose.msra.mxu0 0
  %1193 = vmatprep.subr.bf16.mxu0 0
  %1194 = vmatpush1.bf16.xpose.msra.mxu0 0
  %1195 = vmatprep.subr.bf16.mxu0 0
  %1196 = vmatpush1.bf16.xpose.msra.mxu0 0
  %1197 = vmatprep.subr.bf16.mxu0 0
  %1198 = vmatpush1.bf16.xpose.msra.mxu0 0
  %1199 = vmatprep.subr.bf16.mxu0 0
  %1200 = vmatpush1.bf16.xpose.msra.mxu0 0
  %1201 = vmatprep.subr.bf16.mxu0 0
  %1202 = vmatpush1.bf16.xpose.msra.mxu0 0
  %1203 = vmatprep.subr.bf16.mxu0 0
  %1204 = vmatpush1.bf16.xpose.msra.mxu0 0
  %1205 = vmatprep.mubr.bf16.mxu0 0
  %1206 = vmatmul.mubr.bf16.gmra.mrb[0].mxu0 %v1171
  %v1207 = vpop.f32.mrb[0].mxu0
  %v1208 = vadd.f32 0.0, %v1207
  %v1209 = vpop.f32.mrb[0].mxu0
  %v1210 = vpop.f32.mrb[0].mxu0
  %v1211 = vpop.f32.mrb[0].mxu0
  %1212 = vdwg.mxu0
  %v1213 = vpack.c.bf16 %v1208, %v1208
  %1215 = vset.pattern.permute.xlu0 64
  %1216 = vperm.xlu0 %1215, %v1129
  %v1217 = vpop.permute.xlu0 %1216
  %1220 = vset.pattern.permute.xlu0 64
  %1221 = vperm.xlu0 %1220, %v1130
  %v1222 = vpop.permute.xlu0 %1221
  %1225 = vset.pattern.permute.xlu0 64
  %1226 = vperm.xlu0 %1225, %v1131
  %v1227 = vpop.permute.xlu0 %1226
  %1230 = vset.pattern.permute.xlu0 64
  %1231 = vperm.xlu0 %1230, %v1132
  %v1232 = vpop.permute.xlu0 %1231
  %1235 = vset.pattern.permute.xlu0 64
  %1236 = vperm.xlu0 %1235, %v1133
  %v1237 = vpop.permute.xlu0 %1236
  %1240 = vset.pattern.permute.xlu0 64
  %1241 = vperm.xlu0 %1240, %v1134
  %v1242 = vpop.permute.xlu0 %1241
  %1245 = vset.pattern.permute.xlu0 64
  %1246 = vperm.xlu0 %1245, %v1135
  %v1247 = vpop.permute.xlu0 %1246
  %1250 = vset.pattern.permute.xlu0 64
  %1251 = vperm.xlu0 %1250, %v1136
  %v1252 = vpop.permute.xlu0 %1251
  %v1255 = vpack.i.b16 %v1213, %v1213
  %v1257 = vlaneseq
  %v1258 = vshrl.u32 %v1257, 7
  %v1259 = vsub.s32 0, %v1258
  %v1260 = vrot.slane %v1255, %v1259
  %v1261 = vadd.bf16 %v1217, %v1260
  %v1262 = vadd.bf16 %v1222, %v1260
  %v1263 = vadd.bf16 %v1227, %v1260
  %v1264 = vadd.bf16 %v1232, %v1260
  %v1265 = vadd.bf16 %v1237, %v1260
  %v1266 = vadd.bf16 %v1242, %v1260
  %v1267 = vadd.bf16 %v1247, %v1260
  %v1268 = vadd.bf16 %v1252, %v1260
  %1269 = vset.pattern.permute.xlu0 65
  %1270 = vperm.xlu0 %1269, %v1129
  %v1271 = vpop.permute.xlu0 %1270
  %1273 = vset.pattern.permute.xlu0 65
  %1274 = vperm.xlu0 %1273, %v1130
  %v1275 = vpop.permute.xlu0 %1274
  %1277 = vset.pattern.permute.xlu0 65
  %1278 = vperm.xlu0 %1277, %v1131
  %v1279 = vpop.permute.xlu0 %1278
  %1281 = vset.pattern.permute.xlu0 65
  %1282 = vperm.xlu0 %1281, %v1132
  %v1283 = vpop.permute.xlu0 %1282
  %1285 = vset.pattern.permute.xlu0 65
  %1286 = vperm.xlu0 %1285, %v1133
  %v1287 = vpop.permute.xlu0 %1286
  %1289 = vset.pattern.permute.xlu0 65
  %1290 = vperm.xlu0 %1289, %v1134
  %v1291 = vpop.permute.xlu0 %1290
  %1293 = vset.pattern.permute.xlu0 65
  %1294 = vperm.xlu0 %1293, %v1135
  %v1295 = vpop.permute.xlu0 %1294
  %1297 = vset.pattern.permute.xlu0 65
  %1298 = vperm.xlu0 %1297, %v1136
  %v1299 = vpop.permute.xlu0 %1298
  %v1301 = vshrl.u32 %v1213, 16
  %v1302 = vpack.i.b16 %v1301, %v1301
  %v1304 = vlaneseq
  %v1305 = vshrl.u32 %v1304, 7
  %v1306 = vsub.s32 0, %v1305
  %v1307 = vrot.slane %v1302, %v1306
  %v1308 = vadd.bf16 %v1271, %v1307
  %v1309 = vadd.bf16 %v1275, %v1307
  %v1310 = vadd.bf16 %v1279, %v1307
  %v1311 = vadd.bf16 %v1283, %v1307
  %v1312 = vadd.bf16 %v1287, %v1307
  %v1313 = vadd.bf16 %v1291, %v1307
  %v1314 = vadd.bf16 %v1295, %v1307
  %v1315 = vadd.bf16 %v1299, %v1307
  %v1316 = vmul.bf16 %v1261, %v693
  %v1317 = vmul.bf16 %v1262, %v694
  %v1318 = vmul.bf16 %v1263, %v695
  %v1319 = vmul.bf16 %v1264, %v696
  %v1320 = vmul.bf16 %v1265, %v697
  %v1321 = vmul.bf16 %v1266, %v698
  %v1322 = vmul.bf16 %v1267, %v699
  %v1323 = vmul.bf16 %v1268, %v700
  %v1324 = vmul.bf16 %v1316, 3204497152
  %v1325 = vmul.bf16 %v1317, 3204497152
  %v1326 = vmul.bf16 %v1318, 3204497152
  %v1327 = vmul.bf16 %v1319, 3204497152
  %v1328 = vmul.bf16 %v1320, 3204497152
  %v1329 = vmul.bf16 %v1321, 3204497152
  %v1330 = vmul.bf16 %v1322, 3204497152
  %v1331 = vmul.bf16 %v1323, 3204497152
  %v1332 = vmax.bf16 %v1316, %v1324
  %v1333 = vmax.bf16 %v1317, %v1325
  %v1334 = vmax.bf16 %v1318, %v1326
  %v1335 = vmax.bf16 %v1319, %v1327
  %v1336 = vmax.bf16 %v1320, %v1328
  %v1337 = vmax.bf16 %v1321, %v1329
  %v1338 = vmax.bf16 %v1322, %v1330
  %v1339 = vmax.bf16 %v1323, %v1331
  %v1340 = vmul.bf16 %v1308, %v693
  %v1341 = vmul.bf16 %v1309, %v694
  %v1342 = vmul.bf16 %v1310, %v695
  %v1343 = vmul.bf16 %v1311, %v696
  %v1344 = vmul.bf16 %v1312, %v697
  %v1345 = vmul.bf16 %v1313, %v698
  %v1346 = vmul.bf16 %v1314, %v699
  %v1347 = vmul.bf16 %v1315, %v700
  %v1348 = vmul.bf16 %v1340, 3204497152
  %v1349 = vmul.bf16 %v1341, 3204497152
  %v1350 = vmul.bf16 %v1342, 3204497152
  %v1351 = vmul.bf16 %v1343, 3204497152
  %v1352 = vmul.bf16 %v1344, 3204497152
  %v1353 = vmul.bf16 %v1345, 3204497152
  %v1354 = vmul.bf16 %v1346, 3204497152
  %v1355 = vmul.bf16 %v1347, 3204497152
  %v1356 = vmax.bf16 %v1340, %v1348
  %v1357 = vmax.bf16 %v1341, %v1349
  %v1358 = vmax.bf16 %v1342, %v1350
  %v1359 = vmax.bf16 %v1343, %v1351
  %v1360 = vmax.bf16 %v1344, %v1352
  %v1361 = vmax.bf16 %v1345, %v1353
  %v1362 = vmax.bf16 %v1346, %v1354
  %v1363 = vmax.bf16 %v1347, %v1355
  %v1364 = vpack.c.bf16 %v1044, %v1041
  %v1365 = vpack.c.bf16 %v1052, %v1049
  %v1366 = vpack.c.bf16 %v1060, %v1057
  %v1367 = vpack.c.bf16 %v1068, %v1065
  %v1368 = vpack.c.bf16 %v1076, %v1073
  %v1369 = vpack.c.bf16 %v1084, %v1081
  %v1370 = vpack.c.bf16 %v1092, %v1089
  %v1371 = vpack.c.bf16 %v1100, %v1097
  %v1372 = vsub.f32 0.0, %v1041
  %v1373 = vsub.f32 0.0, %v1044
  %v1374 = vsub.f32 0.0, %v1049
  %v1375 = vsub.f32 0.0, %v1052
  %v1376 = vsub.f32 0.0, %v1057
  %v1377 = vsub.f32 0.0, %v1060
  %v1378 = vsub.f32 0.0, %v1065
  %v1379 = vsub.f32 0.0, %v1068
  %v1380 = vsub.f32 0.0, %v1073
  %v1381 = vsub.f32 0.0, %v1076
  %v1382 = vsub.f32 0.0, %v1081
  %v1383 = vsub.f32 0.0, %v1084
  %v1384 = vsub.f32 0.0, %v1089
  %v1385 = vsub.f32 0.0, %v1092
  %v1386 = vsub.f32 0.0, %v1097
  %v1387 = vsub.f32 0.0, %v1100
  %v1388 = vpack.c.bf16 %v1373, %v1372
  %v1389 = vpack.c.bf16 %v1375, %v1374
  %v1390 = vpack.c.bf16 %v1377, %v1376
  %v1391 = vpack.c.bf16 %v1379, %v1378
  %v1392 = vpack.c.bf16 %v1381, %v1380
  %v1393 = vpack.c.bf16 %v1383, %v1382
  %v1394 = vpack.c.bf16 %v1385, %v1384
  %v1395 = vpack.c.bf16 %v1387, %v1386
  %1404 = vrot.lane.b32.xlu0 %v1388, 96
  %v1405 = vpop.permute.xlu0 %1404
  %1406 = vrot.lane.b32.xlu0 %v1389, 96
  %v1407 = vpop.permute.xlu0 %1406
  %1408 = vrot.lane.b32.xlu0 %v1390, 96
  %v1409 = vpop.permute.xlu0 %1408
  %1410 = vrot.lane.b32.xlu0 %v1391, 96
  %v1411 = vpop.permute.xlu0 %1410
  %1412 = vrot.lane.b32.xlu0 %v1392, 96
  %v1413 = vpop.permute.xlu0 %1412
  %1414 = vrot.lane.b32.xlu0 %v1393, 96
  %v1415 = vpop.permute.xlu0 %1414
  %1416 = vrot.lane.b32.xlu0 %v1394, 96
  %v1417 = vpop.permute.xlu0 %1416
  %1418 = vrot.lane.b32.xlu0 %v1395, 96
  %v1419 = vpop.permute.xlu0 %1418
  %1428 = vmatprep.subr.bf16.mxu0 0
  %1429 = vmatpush1.bf16.msra.mxu0 %v1364
  %1430 = vmatprep.subr.bf16.mxu0 0
  %1431 = vmatpush1.bf16.msra.mxu0 %v1365
  %1432 = vmatprep.subr.bf16.mxu0 0
  %1433 = vmatpush1.bf16.msra.mxu0 %v1366
  %1434 = vmatprep.subr.bf16.mxu0 0
  %1435 = vmatpush1.bf16.msra.mxu0 %v1367
  %1436 = vmatprep.subr.bf16.mxu0 0
  %1437 = vmatpush1.bf16.msra.mxu0 %v1368
  %1438 = vmatprep.subr.bf16.mxu0 0
  %1439 = vmatpush1.bf16.msra.mxu0 %v1369
  %1440 = vmatprep.subr.bf16.mxu0 0
  %1441 = vmatpush1.bf16.msra.mxu0 %v1370
  %1442 = vmatprep.subr.bf16.mxu0 0
  %1443 = vmatpush1.bf16.msra.mxu0 %v1371
  %1444 = vmatprep.subr.bf16.mxu0 0
  %1445 = vmatpush1.bf16.msra.mxu0 %v1405
  %1446 = vmatprep.subr.bf16.mxu0 0
  %1447 = vmatpush1.bf16.msra.mxu0 %v1407
  %1448 = vmatprep.subr.bf16.mxu0 0
  %1449 = vmatpush1.bf16.msra.mxu0 %v1409
  %1450 = vmatprep.subr.bf16.mxu0 0
  %1451 = vmatpush1.bf16.msra.mxu0 %v1411
  %1452 = vmatprep.subr.bf16.mxu0 0
  %1453 = vmatpush1.bf16.msra.mxu0 %v1413
  %1454 = vmatprep.subr.bf16.mxu0 0
  %1455 = vmatpush1.bf16.msra.mxu0 %v1415
  %1456 = vmatprep.subr.bf16.mxu0 0
  %1457 = vmatpush1.bf16.msra.mxu0 %v1417
  %1458 = vmatprep.subr.bf16.mxu0 0
  %1459 = vmatpush1.bf16.msra.mxu0 %v1419
  %1460 = vmatprep.mubr.bf16.mxu0 %v1356
  %1461 = vmatmul.mubr.bf16.gmra.mrb[0].mxu0 %v1332
  %v1462 = vpop.f32.mrb[0].mxu0
  %v1463 = vadd.f32 0.0, %v1462
  %v1464 = vpop.f32.mrb[0].mxu0
  %v1465 = vpop.f32.mrb[0].mxu0
  %v1466 = vadd.f32 0.0, %v1465
  %v1467 = vpop.f32.mrb[0].mxu0
  %1468 = vmatprep.mubr.bf16.mxu0 %v1357
  %1469 = vmatmul.mubr.bf16.gmra.mrb[0].mxu0 %v1333
  %v1470 = vpop.f32.mrb[0].mxu0
  %v1471 = vadd.f32 0.0, %v1470
  %v1472 = vpop.f32.mrb[0].mxu0
  %v1473 = vpop.f32.mrb[0].mxu0
  %v1474 = vadd.f32 0.0, %v1473
  %v1475 = vpop.f32.mrb[0].mxu0
  %1476 = vmatprep.mubr.bf16.mxu0 %v1358
  %1477 = vmatmul.mubr.bf16.gmra.mrb[0].mxu0 %v1334
  %v1478 = vpop.f32.mrb[0].mxu0
  %v1479 = vadd.f32 0.0, %v1478
  %v1480 = vpop.f32.mrb[0].mxu0
  %v1481 = vpop.f32.mrb[0].mxu0
  %v1482 = vadd.f32 0.0, %v1481
  %v1483 = vpop.f32.mrb[0].mxu0
  %1484 = vmatprep.mubr.bf16.mxu0 %v1359
  %1485 = vmatmul.mubr.bf16.gmra.mrb[0].mxu0 %v1335
  %v1486 = vpop.f32.mrb[0].mxu0
  %v1487 = vadd.f32 0.0, %v1486
  %v1488 = vpop.f32.mrb[0].mxu0
  %v1489 = vpop.f32.mrb[0].mxu0
  %v1490 = vadd.f32 0.0, %v1489
  %v1491 = vpop.f32.mrb[0].mxu0
  %1492 = vmatprep.mubr.bf16.mxu0 %v1360
  %1493 = vmatmul.mubr.bf16.gmra.mrb[0].mxu0 %v1336
  %v1494 = vpop.f32.mrb[0].mxu0
  %v1495 = vadd.f32 0.0, %v1494
  %v1496 = vpop.f32.mrb[0].mxu0
  %v1497 = vpop.f32.mrb[0].mxu0
  %v1498 = vadd.f32 0.0, %v1497
  %v1499 = vpop.f32.mrb[0].mxu0
  %1500 = vmatprep.mubr.bf16.mxu0 %v1361
  %1501 = vmatmul.mubr.bf16.gmra.mrb[0].mxu0 %v1337
  %v1502 = vpop.f32.mrb[0].mxu0
  %v1503 = vadd.f32 0.0, %v1502
  %v1504 = vpop.f32.mrb[0].mxu0
  %v1505 = vpop.f32.mrb[0].mxu0
  %v1506 = vadd.f32 0.0, %v1505
  %v1507 = vpop.f32.mrb[0].mxu0
  %1508 = vmatprep.mubr.bf16.mxu0 %v1362
  %1509 = vmatmul.mubr.bf16.gmra.mrb[0].mxu0 %v1338
  %v1510 = vpop.f32.mrb[0].mxu0
  %v1511 = vadd.f32 0.0, %v1510
  %v1512 = vpop.f32.mrb[0].mxu0
  %v1513 = vpop.f32.mrb[0].mxu0
  %v1514 = vadd.f32 0.0, %v1513
  %v1515 = vpop.f32.mrb[0].mxu0
  %1516 = vmatprep.mubr.bf16.mxu0 %v1363
  %1517 = vmatmul.mubr.bf16.gmra.mrb[0].mxu0 %v1339
  %v1518 = vpop.f32.mrb[0].mxu0
  %v1519 = vadd.f32 0.0, %v1518
  %v1520 = vpop.f32.mrb[0].mxu0
  %v1521 = vpop.f32.mrb[0].mxu0
  %v1522 = vadd.f32 0.0, %v1521
  %v1523 = vpop.f32.mrb[0].mxu0
  %1524 = vdwg.mxu0
  %v1525 = vadd.f32 %v272, %v1463
  %v1526 = vadd.f32 %v273, %v1466
  %v1527 = vadd.f32 %v274, %v1471
  %v1528 = vadd.f32 %v275, %v1474
  %v1529 = vadd.f32 %v276, %v1479
  %v1530 = vadd.f32 %v277, %v1482
  %v1531 = vadd.f32 %v278, %v1487
  %v1532 = vadd.f32 %v279, %v1490
  %v1533 = vadd.f32 %v280, %v1495
  %v1534 = vadd.f32 %v281, %v1498
  %v1535 = vadd.f32 %v282, %v1503
  %v1536 = vadd.f32 %v283, %v1506
  %v1537 = vadd.f32 %v284, %v1511
  %v1538 = vadd.f32 %v285, %v1514
  %v1539 = vadd.f32 %v286, %v1519
  %v1540 = vadd.f32 %v287, %v1522
  %s1541 = scalar_lea.vmem %s7, 1
  %v1542 = vld [vmem:[%s1541] sm:$0x1]
  %v1544 = vlaneseq
  %v1545 = vshrl.u32 %v1544, 7
  %v1546 = vsub.s32 0, %v1545
  %v1547 = vrot.slane %v1542, %v1546
  %v1549 = vadd.f32 %v1525, %v1547
  %v1550 = vadd.f32 %v1526, %v1547
  %v1551 = vadd.f32 %v1527, %v1547
  %v1552 = vadd.f32 %v1528, %v1547
  %v1553 = vadd.f32 %v1529, %v1547
  %v1554 = vadd.f32 %v1530, %v1547
  %v1555 = vadd.f32 %v1531, %v1547
  %v1556 = vadd.f32 %v1532, %v1547
  %v1557 = vadd.f32 %v1533, %v1547
  %v1558 = vadd.f32 %v1534, %v1547
  %v1559 = vadd.f32 %v1535, %v1547
  %v1560 = vadd.f32 %v1536, %v1547
  %v1561 = vadd.f32 %v1537, %v1547
  %v1562 = vadd.f32 %v1538, %v1547
  %v1563 = vadd.f32 %v1539, %v1547
  %v1564 = vadd.f32 %v1540, %v1547
  %v1565 = vld [vmem:[%s8] sm:$0xff]
  %v1566 = vld [vmem:[%s8 + $0x8] sm:$0xff]
  %v1567 = vld [vmem:[%s8 + $0x10] sm:$0xff]
  %v1568 = vld [vmem:[%s8 + $0x18] sm:$0xff]
  %v1569 = vld [vmem:[%s9] sm:$0x1]
  %v1571 = vlaneseq
  %v1572 = vshrl.u32 %v1571, 7
  %v1573 = vsub.s32 0, %v1572
  %v1574 = vrot.slane %v1569, %v1573
  %v1577 = vsel %vm328, %v1549, 0
  %v1580 = vsel %vm328, %v1550, 0
  %v1583 = vsel %vm328, %v1551, 0
  %v1586 = vsel %vm328, %v1552, 0
  %v1589 = vsel %vm328, %v1553, 0
  %v1592 = vsel %vm328, %v1554, 0
  %v1595 = vsel %vm328, %v1555, 0
  %v1598 = vsel %vm328, %v1556, 0
  %v1601 = vsel %vm328, %v1557, 0
  %v1604 = vsel %vm328, %v1558, 0
  %v1607 = vsel %vm328, %v1559, 0
  %v1610 = vsel %vm328, %v1560, 0
  %v1613 = vsel %vm328, %v1561, 0
  %v1616 = vsel %vm328, %v1562, 0
  %v1619 = vsel %vm328, %v1563, 0
  %v1622 = vsel %vm328, %v1564, 0
  %1624 = vmatprep.subr.mxu0 0.0
  %1625 = vmatpush1.msra.mxu0 %v1565
  %1626 = vmatprep.subr.mxu0 0.0
  %1627 = vmatpush1.msra.mxu0 %v1566
  %1628 = vmatprep.subr.mxu0 0.0
  %1629 = vmatpush1.msra.mxu0 %v1567
  %1630 = vmatprep.subr.mxu0 0.0
  %1631 = vmatpush1.msra.mxu0 %v1568
  %1632 = vmatprep.subr.mxu0 0.0
  %1633 = vmatpush1.msra.mxu0 0.0
  %1634 = vmatprep.subr.mxu0 0.0
  %1635 = vmatpush1.msra.mxu0 0.0
  %1636 = vmatprep.subr.mxu0 0.0
  %1637 = vmatpush1.msra.mxu0 0.0
  %1638 = vmatprep.subr.mxu0 0.0
  %1639 = vmatpush1.msra.mxu0 0.0
  %1640 = vmatprep.subr.mxu0 0.0
  %1641 = vmatpush1.msra.mxu0 0.0
  %1642 = vmatprep.subr.mxu0 0.0
  %1643 = vmatpush1.msra.mxu0 0.0
  %1644 = vmatprep.subr.mxu0 0.0
  %1645 = vmatpush1.msra.mxu0 0.0
  %1646 = vmatprep.subr.mxu0 0.0
  %1647 = vmatpush1.msra.mxu0 0.0
  %1648 = vmatprep.subr.mxu0 0.0
  %1649 = vmatpush1.msra.mxu0 0.0
  %1650 = vmatprep.subr.mxu0 0.0
  %1651 = vmatpush1.msra.mxu0 0.0
  %1652 = vmatprep.subr.mxu0 0.0
  %1653 = vmatpush1.msra.mxu0 0.0
  %1654 = vmatprep.subr.mxu0 0.0
  %1655 = vmatpush1.msra.mxu0 0.0
  %1656 = vmatprep.subr.mxu0 0.0
  %1657 = vmatpush1.msra.mxu0 0.0
  %1658 = vmatprep.subr.mxu0 0.0
  %1659 = vmatpush1.msra.mxu0 0.0
  %1660 = vmatprep.subr.mxu0 0.0
  %1661 = vmatpush1.msra.mxu0 0.0
  %1662 = vmatprep.subr.mxu0 0.0
  %1663 = vmatpush1.msra.mxu0 0.0
  %1664 = vmatprep.subr.mxu0 0.0
  %1665 = vmatpush1.msra.mxu0 0.0
  %1666 = vmatprep.subr.mxu0 0.0
  %1667 = vmatpush1.msra.mxu0 0.0
  %1668 = vmatprep.subr.mxu0 0.0
  %1669 = vmatpush1.msra.mxu0 0.0
  %1670 = vmatprep.subr.mxu0 0.0
  %1671 = vmatpush1.msra.mxu0 0.0
  %1672 = vmatprep.subr.mxu0 0.0
  %1673 = vmatpush1.msra.mxu0 0.0
  %1674 = vmatprep.subr.mxu0 0.0
  %1675 = vmatpush1.msra.mxu0 0.0
  %1676 = vmatprep.subr.mxu0 0.0
  %1677 = vmatpush1.msra.mxu0 0.0
  %1678 = vmatprep.subr.mxu0 0.0
  %1679 = vmatpush1.msra.mxu0 0.0
  %1680 = vmatprep.subr.mxu0 0.0
  %1681 = vmatpush1.msra.mxu0 0.0
  %1682 = vmatprep.subr.mxu0 0.0
  %1683 = vmatpush1.msra.mxu0 0.0
  %1684 = vmatprep.subr.mxu0 0.0
  %1685 = vmatpush1.msra.mxu0 0.0
  %1686 = vmatprep.subr.mxu0 0.0
  %1687 = vmatpush1.msra.mxu0 0.0
  %1688 = vmatprep.mubr.f32.mxu0 0.0
  %1689 = vmatmul.mubr.f32.gmra.mrb[0].mxu0 %v1577
  %v1690 = vpop.f32.mrb[0].mxu0
  %v1691 = vadd.f32 %v1574, %v1690
  %v1692 = vpop.f32.mrb[0].mxu0
  %1693 = vmatprep.mubr.f32.mxu0 0.0
  %1694 = vmatmul.mubr.f32.gmra.mrb[0].mxu0 %v1580
  %v1695 = vpop.f32.mrb[0].mxu0
  %v1696 = vadd.f32 %v1574, %v1695
  %v1697 = vpop.f32.mrb[0].mxu0
  %1698 = vmatprep.mubr.f32.mxu0 0.0
  %1699 = vmatmul.mubr.f32.gmra.mrb[0].mxu0 %v1583
  %v1700 = vpop.f32.mrb[0].mxu0
  %v1701 = vadd.f32 %v1574, %v1700
  %v1702 = vpop.f32.mrb[0].mxu0
  %1703 = vmatprep.mubr.f32.mxu0 0.0
  %1704 = vmatmul.mubr.f32.gmra.mrb[0].mxu0 %v1586
  %v1705 = vpop.f32.mrb[0].mxu0
  %v1706 = vadd.f32 %v1574, %v1705
  %v1707 = vpop.f32.mrb[0].mxu0
  %1708 = vmatprep.mubr.f32.mxu0 0.0
  %1709 = vmatmul.mubr.f32.gmra.mrb[0].mxu0 %v1589
  %v1710 = vpop.f32.mrb[0].mxu0
  %v1711 = vadd.f32 %v1574, %v1710
  %v1712 = vpop.f32.mrb[0].mxu0
  %1713 = vmatprep.mubr.f32.mxu0 0.0
  %1714 = vmatmul.mubr.f32.gmra.mrb[0].mxu0 %v1592
  %v1715 = vpop.f32.mrb[0].mxu0
  %v1716 = vadd.f32 %v1574, %v1715
  %v1717 = vpop.f32.mrb[0].mxu0
  %1718 = vmatprep.mubr.f32.mxu0 0.0
  %1719 = vmatmul.mubr.f32.gmra.mrb[0].mxu0 %v1595
  %v1720 = vpop.f32.mrb[0].mxu0
  %v1721 = vadd.f32 %v1574, %v1720
  %v1722 = vpop.f32.mrb[0].mxu0
  %1723 = vmatprep.mubr.f32.mxu0 0.0
  %1724 = vmatmul.mubr.f32.gmra.mrb[0].mxu0 %v1598
  %v1725 = vpop.f32.mrb[0].mxu0
  %v1726 = vadd.f32 %v1574, %v1725
  %v1727 = vpop.f32.mrb[0].mxu0
  %1728 = vmatprep.mubr.f32.mxu0 0.0
  %1729 = vmatmul.mubr.f32.gmra.mrb[0].mxu0 %v1601
  %v1730 = vpop.f32.mrb[0].mxu0
  %v1731 = vadd.f32 %v1574, %v1730
  %v1732 = vpop.f32.mrb[0].mxu0
  %1733 = vmatprep.mubr.f32.mxu0 0.0
  %1734 = vmatmul.mubr.f32.gmra.mrb[0].mxu0 %v1604
  %v1735 = vpop.f32.mrb[0].mxu0
  %v1736 = vadd.f32 %v1574, %v1735
  %v1737 = vpop.f32.mrb[0].mxu0
  %1738 = vmatprep.mubr.f32.mxu0 0.0
  %1739 = vmatmul.mubr.f32.gmra.mrb[0].mxu0 %v1607
  %v1740 = vpop.f32.mrb[0].mxu0
  %v1741 = vadd.f32 %v1574, %v1740
  %v1742 = vpop.f32.mrb[0].mxu0
  %1743 = vmatprep.mubr.f32.mxu0 0.0
  %1744 = vmatmul.mubr.f32.gmra.mrb[0].mxu0 %v1610
  %v1745 = vpop.f32.mrb[0].mxu0
  %v1746 = vadd.f32 %v1574, %v1745
  %v1747 = vpop.f32.mrb[0].mxu0
  %1748 = vmatprep.mubr.f32.mxu0 0.0
  %1749 = vmatmul.mubr.f32.gmra.mrb[0].mxu0 %v1613
  %v1750 = vpop.f32.mrb[0].mxu0
  %v1751 = vadd.f32 %v1574, %v1750
  %v1752 = vpop.f32.mrb[0].mxu0
  %1753 = vmatprep.mubr.f32.mxu0 0.0
  %1754 = vmatmul.mubr.f32.gmra.mrb[0].mxu0 %v1616
  %v1755 = vpop.f32.mrb[0].mxu0
  %v1756 = vadd.f32 %v1574, %v1755
  %v1757 = vpop.f32.mrb[0].mxu0
  %1758 = vmatprep.mubr.f32.mxu0 0.0
  %1759 = vmatmul.mubr.f32.gmra.mrb[0].mxu0 %v1619
  %v1760 = vpop.f32.mrb[0].mxu0
  %v1761 = vadd.f32 %v1574, %v1760
  %v1762 = vpop.f32.mrb[0].mxu0
  %1763 = vmatprep.mubr.f32.mxu0 0.0
  %1764 = vmatmul.mubr.f32.gmra.mrb[0].mxu0 %v1622
  %v1765 = vpop.f32.mrb[0].mxu0
  %v1766 = vadd.f32 %v1574, %v1765
  %v1767 = vpop.f32.mrb[0].mxu0
  %1768 = vdwg.mxu0
  %vm1769 = vcmask 64512
  %v1770 = vsel %vm1769, %v1691, -inf
  %1771 = vmax.xlane.f32.xlu0 %v1770
  %v1772 = vpop.xlane.xlu0 %1771
  %v1773 = vsel %vm1769, %v1696, -inf
  %1774 = vmax.xlane.f32.xlu0 %v1773
  %v1775 = vpop.xlane.xlu0 %1774
  %v1776 = vsel %vm1769, %v1701, -inf
  %1777 = vmax.xlane.f32.xlu0 %v1776
  %v1778 = vpop.xlane.xlu0 %1777
  %v1779 = vsel %vm1769, %v1706, -inf
  %1780 = vmax.xlane.f32.xlu0 %v1779
  %v1781 = vpop.xlane.xlu0 %1780
  %v1782 = vsel %vm1769, %v1711, -inf
  %1783 = vmax.xlane.f32.xlu0 %v1782
  %v1784 = vpop.xlane.xlu0 %1783
  %v1785 = vsel %vm1769, %v1716, -inf
  %1786 = vmax.xlane.f32.xlu0 %v1785
  %v1787 = vpop.xlane.xlu0 %1786
  %v1788 = vsel %vm1769, %v1721, -inf
  %1789 = vmax.xlane.f32.xlu0 %v1788
  %v1790 = vpop.xlane.xlu0 %1789
  %v1791 = vsel %vm1769, %v1726, -inf
  %1792 = vmax.xlane.f32.xlu0 %v1791
  %v1793 = vpop.xlane.xlu0 %1792
  %v1794 = vsel %vm1769, %v1731, -inf
  %1795 = vmax.xlane.f32.xlu0 %v1794
  %v1796 = vpop.xlane.xlu0 %1795
  %v1797 = vsel %vm1769, %v1736, -inf
  %1798 = vmax.xlane.f32.xlu0 %v1797
  %v1799 = vpop.xlane.xlu0 %1798
  %v1800 = vsel %vm1769, %v1741, -inf
  %1801 = vmax.xlane.f32.xlu0 %v1800
  %v1802 = vpop.xlane.xlu0 %1801
  %v1803 = vsel %vm1769, %v1746, -inf
  %1804 = vmax.xlane.f32.xlu0 %v1803
  %v1805 = vpop.xlane.xlu0 %1804
  %v1806 = vsel %vm1769, %v1751, -inf
  %1807 = vmax.xlane.f32.xlu0 %v1806
  %v1808 = vpop.xlane.xlu0 %1807
  %v1809 = vsel %vm1769, %v1756, -inf
  %1810 = vmax.xlane.f32.xlu0 %v1809
  %v1811 = vpop.xlane.xlu0 %1810
  %v1812 = vsel %vm1769, %v1761, -inf
  %1813 = vmax.xlane.f32.xlu0 %v1812
  %v1814 = vpop.xlane.xlu0 %1813
  %v1815 = vsel %vm1769, %v1766, -inf
  %1816 = vmax.xlane.f32.xlu0 %v1815
  %v1817 = vpop.xlane.xlu0 %1816
  %v1818 = vsub.f32 %v1691, %v1772
  %v1819 = vsub.f32 %v1696, %v1775
  %v1820 = vsub.f32 %v1701, %v1778
  %v1821 = vsub.f32 %v1706, %v1781
  %v1822 = vsub.f32 %v1711, %v1784
  %v1823 = vsub.f32 %v1716, %v1787
  %v1824 = vsub.f32 %v1721, %v1790
  %v1825 = vsub.f32 %v1726, %v1793
  %v1826 = vsub.f32 %v1731, %v1796
  %v1827 = vsub.f32 %v1736, %v1799
  %v1828 = vsub.f32 %v1741, %v1802
  %v1829 = vsub.f32 %v1746, %v1805
  %v1830 = vsub.f32 %v1751, %v1808
  %v1831 = vsub.f32 %v1756, %v1811
  %v1832 = vsub.f32 %v1761, %v1814
  %v1833 = vsub.f32 %v1766, %v1817
  %v1834 = vmul.f32 %v1818, 1.442695
  %v1835 = vpow.pop %v1834
  %v1836 = vmul.f32 %v1819, 1.442695
  %v1837 = vpow.pop %v1836
  %v1838 = vmul.f32 %v1820, 1.442695
  %v1839 = vpow.pop %v1838
  %v1840 = vmul.f32 %v1821, 1.442695
  %v1841 = vpow.pop %v1840
  %v1842 = vmul.f32 %v1822, 1.442695
  %v1843 = vpow.pop %v1842
  %v1844 = vmul.f32 %v1823, 1.442695
  %v1845 = vpow.pop %v1844
  %v1846 = vmul.f32 %v1824, 1.442695
  %v1847 = vpow.pop %v1846
  %v1848 = vmul.f32 %v1825, 1.442695
  %v1849 = vpow.pop %v1848
  %v1850 = vmul.f32 %v1826, 1.442695
  %v1851 = vpow.pop %v1850
  %v1852 = vmul.f32 %v1827, 1.442695
  %v1853 = vpow.pop %v1852
  %v1854 = vmul.f32 %v1828, 1.442695
  %v1855 = vpow.pop %v1854
  %v1856 = vmul.f32 %v1829, 1.442695
  %v1857 = vpow.pop %v1856
  %v1858 = vmul.f32 %v1830, 1.442695
  %v1859 = vpow.pop %v1858
  %v1860 = vmul.f32 %v1831, 1.442695
  %v1861 = vpow.pop %v1860
  %v1862 = vmul.f32 %v1832, 1.442695
  %v1863 = vpow.pop %v1862
  %v1864 = vmul.f32 %v1833, 1.442695
  %v1865 = vpow.pop %v1864
  %v1866 = vsel %vm1769, %v1835, 0.0
  %1867 = vadd.xlane.f32.xlu0 %v1866
  %v1868 = vpop.xlane.xlu0 %1867
  %v1869 = vsel %vm1769, %v1837, 0.0
  %1870 = vadd.xlane.f32.xlu0 %v1869
  %v1871 = vpop.xlane.xlu0 %1870
  %v1872 = vsel %vm1769, %v1839, 0.0
  %1873 = vadd.xlane.f32.xlu0 %v1872
  %v1874 = vpop.xlane.xlu0 %1873
  %v1875 = vsel %vm1769, %v1841, 0.0
  %1876 = vadd.xlane.f32.xlu0 %v1875
  %v1877 = vpop.xlane.xlu0 %1876
  %v1878 = vsel %vm1769, %v1843, 0.0
  %1879 = vadd.xlane.f32.xlu0 %v1878
  %v1880 = vpop.xlane.xlu0 %1879
  %v1881 = vsel %vm1769, %v1845, 0.0
  %1882 = vadd.xlane.f32.xlu0 %v1881
  %v1883 = vpop.xlane.xlu0 %1882
  %v1884 = vsel %vm1769, %v1847, 0.0
  %1885 = vadd.xlane.f32.xlu0 %v1884
  %v1886 = vpop.xlane.xlu0 %1885
  %v1887 = vsel %vm1769, %v1849, 0.0
  %1888 = vadd.xlane.f32.xlu0 %v1887
  %v1889 = vpop.xlane.xlu0 %1888
  %v1890 = vsel %vm1769, %v1851, 0.0
  %1891 = vadd.xlane.f32.xlu0 %v1890
  %v1892 = vpop.xlane.xlu0 %1891
  %v1893 = vsel %vm1769, %v1853, 0.0
  %1894 = vadd.xlane.f32.xlu0 %v1893
  %v1895 = vpop.xlane.xlu0 %1894
  %v1896 = vsel %vm1769, %v1855, 0.0
  %1897 = vadd.xlane.f32.xlu0 %v1896
  %v1898 = vpop.xlane.xlu0 %1897
  %v1899 = vsel %vm1769, %v1857, 0.0
  %1900 = vadd.xlane.f32.xlu0 %v1899
  %v1901 = vpop.xlane.xlu0 %1900
  %v1902 = vsel %vm1769, %v1859, 0.0
  %1903 = vadd.xlane.f32.xlu0 %v1902
  %v1904 = vpop.xlane.xlu0 %1903
  %v1905 = vsel %vm1769, %v1861, 0.0
  %1906 = vadd.xlane.f32.xlu0 %v1905
  %v1907 = vpop.xlane.xlu0 %1906
  %v1908 = vsel %vm1769, %v1863, 0.0
  %1909 = vadd.xlane.f32.xlu0 %v1908
  %v1910 = vpop.xlane.xlu0 %1909
  %v1911 = vsel %vm1769, %v1865, 0.0
  %1912 = vadd.xlane.f32.xlu0 %v1911
  %v1913 = vpop.xlane.xlu0 %1912
  %v1914 = vlog2.pop %v1868
  %v1915 = vmul.f32 %v1914, 0.6931472
  %v1916 = vlog2.pop %v1871
  %v1917 = vmul.f32 %v1916, 0.6931472
  %v1918 = vlog2.pop %v1874
  %v1919 = vmul.f32 %v1918, 0.6931472
  %v1920 = vlog2.pop %v1877
  %v1921 = vmul.f32 %v1920, 0.6931472
  %v1922 = vlog2.pop %v1880
  %v1923 = vmul.f32 %v1922, 0.6931472
  %v1924 = vlog2.pop %v1883
  %v1925 = vmul.f32 %v1924, 0.6931472
  %v1926 = vlog2.pop %v1886
  %v1927 = vmul.f32 %v1926, 0.6931472
  %v1928 = vlog2.pop %v1889
  %v1929 = vmul.f32 %v1928, 0.6931472
  %v1930 = vlog2.pop %v1892
  %v1931 = vmul.f32 %v1930, 0.6931472
  %v1932 = vlog2.pop %v1895
  %v1933 = vmul.f32 %v1932, 0.6931472
  %v1934 = vlog2.pop %v1898
  %v1935 = vmul.f32 %v1934, 0.6931472
  %v1936 = vlog2.pop %v1901
  %v1937 = vmul.f32 %v1936, 0.6931472
  %v1938 = vlog2.pop %v1904
  %v1939 = vmul.f32 %v1938, 0.6931472
  %v1940 = vlog2.pop %v1907
  %v1941 = vmul.f32 %v1940, 0.6931472
  %v1942 = vlog2.pop %v1910
  %v1943 = vmul.f32 %v1942, 0.6931472
  %v1944 = vlog2.pop %v1913
  %v1945 = vmul.f32 %v1944, 0.6931472
  %v1946 = vadd.f32 %v1915, %v1772
  %v1947 = vadd.f32 %v1917, %v1775
  %v1948 = vadd.f32 %v1919, %v1778
  %v1949 = vadd.f32 %v1921, %v1781
  %v1950 = vadd.f32 %v1923, %v1784
  %v1951 = vadd.f32 %v1925, %v1787
  %v1952 = vadd.f32 %v1927, %v1790
  %v1953 = vadd.f32 %v1929, %v1793
  %v1954 = vadd.f32 %v1931, %v1796
  %v1955 = vadd.f32 %v1933, %v1799
  %v1956 = vadd.f32 %v1935, %v1802
  %v1957 = vadd.f32 %v1937, %v1805
  %v1958 = vadd.f32 %v1939, %v1808
  %v1959 = vadd.f32 %v1941, %v1811
  %v1960 = vadd.f32 %v1943, %v1814
  %v1961 = vadd.f32 %v1945, %v1817
  %v1962 = vsub.f32 %v1691, %v1946
  %v1963 = vsub.f32 %v1696, %v1947
  %v1964 = vsub.f32 %v1701, %v1948
  %v1965 = vsub.f32 %v1706, %v1949
  %v1966 = vsub.f32 %v1711, %v1950
  %v1967 = vsub.f32 %v1716, %v1951
  %v1968 = vsub.f32 %v1721, %v1952
  %v1969 = vsub.f32 %v1726, %v1953
  %v1970 = vsub.f32 %v1731, %v1954
  %v1971 = vsub.f32 %v1736, %v1955
  %v1972 = vsub.f32 %v1741, %v1956
  %v1973 = vsub.f32 %v1746, %v1957
  %v1974 = vsub.f32 %v1751, %v1958
  %v1975 = vsub.f32 %v1756, %v1959
  %v1976 = vsub.f32 %v1761, %v1960
  %v1977 = vsub.f32 %v1766, %v1961
  %1978 = vst.msk [vmem:[%s10] sm:$0xff] %vm1769, %v1962
  %1979 = vst.msk [vmem:[%s10 + $0x8] sm:$0xff] %vm1769, %v1963
  %1980 = vst.msk [vmem:[%s10 + $0x10] sm:$0xff] %vm1769, %v1964
  %1981 = vst.msk [vmem:[%s10 + $0x18] sm:$0xff] %vm1769, %v1965
  %1982 = vst.msk [vmem:[%s10 + $0x20] sm:$0xff] %vm1769, %v1966
  %1983 = vst.msk [vmem:[%s10 + $0x28] sm:$0xff] %vm1769, %v1967
  %1984 = vst.msk [vmem:[%s10 + $0x30] sm:$0xff] %vm1769, %v1968
  %1985 = vst.msk [vmem:[%s10 + $0x38] sm:$0xff] %vm1769, %v1969
  %1986 = vst.msk [vmem:[%s10 + $0x40] sm:$0xff] %vm1769, %v1970
  %1987 = vst.msk [vmem:[%s10 + $0x48] sm:$0xff] %vm1769, %v1971
  %1988 = vst.msk [vmem:[%s10 + $0x50] sm:$0xff] %vm1769, %v1972
  %1989 = vst.msk [vmem:[%s10 + $0x58] sm:$0xff] %vm1769, %v1973
  %1990 = vst.msk [vmem:[%s10 + $0x60] sm:$0xff] %vm1769, %v1974
  %1991 = vst.msk [vmem:[%s10 + $0x68] sm:$0xff] %vm1769, %v1975
  %1992 = vst.msk [vmem:[%s10 + $0x70] sm:$0xff] %vm1769, %v1976
  %1993 = vst.msk [vmem:[%s10 + $0x78] sm:$0xff] %vm1769, %v1977
  // Predicated region
  $region42: #{tpu_custom_call.1} parent=0 // pred_check
    _
  $region43: #{tpu_custom_call.1} parent=0 // pred_check_branch
    %1995 = sbr.rel (0) target = $region45
  $region44: #{tpu_custom_call.1} parent=0 // pred_region
    _
  $region45: #{tpu_custom_call.1} parent=0 // pred_fallthru
    _
  // Predicated region
  $region46: #{tpu_custom_call.1} parent=0 // pred_check
    _
  $region47: #{tpu_custom_call.1} parent=0 // pred_check_branch
    %1997 = sbr.rel (0) target = $region49
  $region48: #{tpu_custom_call.1} parent=0 // pred_region
    _
  $region49: #{tpu_custom_call.1} parent=0 // pred_fallthru
    _

</llo_original>
